<compile_context>
chip_gen: v7x
topology: tpu7x:2x2x1
jax: 0.10.0
libtpu: 0.0.40
codegen_flags: <defaults>
</compile_context>

<pallas_src>
import jax
import jax.numpy as jnp
from jax.experimental import pallas as pl
from jax.experimental.pallas import tpu as pltpu


OPAD = 128  # lane-dense padded width of the fused fc output


# ------------------------------ fused kernel --------------------------------
def _fused_kernel(x_ref, wbe_ref, bbe_ref, gamma_ref, beta_ref,
                  w2_ref, b2_ref, wih0_ref, whh0_ref, b0g_ref,
                  wcat1_ref, b1g_ref, wfp_ref, bfp_ref, out_ref):
    B, T, F = x_ref.shape
    E = w2_ref.shape[1]

    # -------- embed stage (backbone Linear fused into the first Linear) -----
    x = x_ref[...].reshape(B * T, F)                        # row = b*T + t
    h = jnp.dot(x, wbe_ref[...], preferred_element_type=jnp.float32) + bbe_ref[...]

    # BatchNorm1d (train mode): per-timestep batch statistics over the B axis
    h3 = h.reshape(B, T, E)
    mean = jnp.mean(h3, axis=0, keepdims=True)
    var = jnp.mean((h3 - mean) ** 2, axis=0, keepdims=True)
    hn = (h3 - mean) * jax.lax.rsqrt(var + 1e-5)
    hn = hn * gamma_ref[...] + beta_ref[...]
    # ELU (alpha = 1); clamp the exp argument so the unselected branch is finite
    e = jnp.where(hn > 0, hn, jnp.exp(jnp.minimum(hn, 0.0)) - 1.0)
    emb = jnp.dot(e.reshape(B * T, E), w2_ref[...],
                  preferred_element_type=jnp.float32) + b2_ref[...]   # (B*T, E)

    # ------- LSTM layer-0 input matmul hoisted out of the recurrence --------
    gx0 = (jnp.dot(emb, wih0_ref[...], preferred_element_type=jnp.float32)
           + b0g_ref[...]).reshape(B, T, 4 * E)             # gx0[s] = (T, 4E)

    def gates(pre):
        # one full-width (4E = 128 lane) sigmoid; 'g' columns were pre-scaled
        # by 2 in param prep so that 2*sigmoid(2x)-1 == tanh(x)
        a = jax.nn.sigmoid(pre)
        i = a[:, 0 * E:1 * E]
        f = a[:, 1 * E:2 * E]
        g = 2.0 * a[:, 2 * E:3 * E] - 1.0
        o = a[:, 3 * E:4 * E]
        return i, f, g, o

    zeros = jnp.zeros((T, E), jnp.float32)
    h0, c0, h1, c1 = zeros, zeros, zeros, zeros

    # ---------- skewed 2-layer recurrence over the B "sequence" steps -------
    # iteration k: layer-0 processes step k, layer-1 processes step k-1.
    # Both pre-activations depend only on iteration k-1 state, so the two MXU
    # matmuls and the two sigmoids inside one iteration are independent.
    for k in range(B + 1):                                  # static full unroll
        pre0 = pre1 = None
        if k > 0:
            # h0 here is the layer-0 output of step k-1 (from iteration k-1)
            xcat = jnp.concatenate([h0, h1], axis=1)        # (T, 2E)
            pre1 = jnp.dot(xcat, wcat1_ref[...],
                           preferred_element_type=jnp.float32) + b1g_ref[...]
        if k < B:
            pre0 = gx0[k] + jnp.dot(h0, whh0_ref[...],
                                    preferred_element_type=jnp.float32)
        if k > 0:
            i1, f1, g1, o1 = gates(pre1)
            c1 = f1 * c1 + i1 * g1
            h1 = o1 * jnp.tanh(c1)
            # per-step fused fc + lane-dense, sublane-aligned unmasked store
            out_ref[pl.ds((k - 1) * T, T), :] = (
                jnp.dot(h1, wfp_ref[...], preferred_element_type=jnp.float32)
                + bfp_ref[...])
        if k < B:
            i0, f0, g0, o0 = gates(pre0)
            c0 = f0 * c0 + i0 * g0
            h0 = o0 * jnp.tanh(c0)


# --------------------- one-time parameter preparation ------------------------
def prepare_params(params):
    """Hoists all weight preprocessing out of the per-call hot path."""
    E = params["W1"].shape[1]
    O = params["Wf"].shape[1]

    # bake tanh(x) = 2*sigmoid(2x) - 1 into the 'g' gate columns
    sc = lambda a: a.at[..., 2 * E:3 * E].multiply(2.0)

    # algebraic fusion of the frozen backbone Linear and the first embed Linear
    Wbe = (params["Wb"] @ params["W1"]).astype(jnp.float32)            # (F, E)
    bbe = (params["bb"] @ params["W1"] + params["b1"]).astype(jnp.float32)

    prepped = {
        "Wbe": Wbe, "bbe": bbe,
        "gamma": params["gamma"], "beta": params["beta"],
        "W2": params["W2"], "b2": params["b2"],
        "Wih0": sc(params["Wih0"]), "Whh0": sc(params["Whh0"]),
        "b0g": sc(params["blstm0"]),
        "Wcat1": sc(jnp.concatenate([params["Wih1"], params["Whh1"]], axis=0)),
        "b1g": sc(params["blstm1"]),
        # pad the fc to a lane-dense 128-wide output; sliced back after the kernel
        "Wfp": jnp.zeros((E, OPAD), jnp.float32).at[:, :O].set(params["Wf"]),
        "bfp": jnp.zeros((1, OPAD), jnp.float32).at[:, :O].set(params["bf"]),
    }
    return prepped, O


# ------------------------------ wrapper --------------------------------------
def lstm_tcm_forward(x_btf, pp, num_classes=5):
    B, T, F = x_btf.shape
    E = pp["W2"].shape[1]

    full = lambda shape: pl.BlockSpec(shape, lambda i: (0,) * len(shape))
    out = pl.pallas_call(
        _fused_kernel,
        out_shape=jax.ShapeDtypeStruct((B * T, OPAD), jnp.float32),
        grid_spec=pltpu.PrefetchScalarGridSpec(
            num_scalar_prefetch=0,
            grid=(1,),
            in_specs=[
                full((B, T, F)),
                full((F, E)), full((1, E)),
                full((1, E)), full((1, E)),
                full((E, E)), full((1, E)),
                full((E, 4 * E)), full((E, 4 * E)), full((1, 4 * E)),
                full((2 * E, 4 * E)), full((1, 4 * E)),
                full((E, OPAD)), full((1, OPAD)),
            ],
            out_specs=full((B * T, OPAD)),
        ),
        compiler_params=pltpu.CompilerParams(
            dimension_semantics=("arbitrary",)),
    )(x_btf, pp["Wbe"], pp["bbe"], pp["gamma"], pp["beta"], pp["W2"], pp["b2"],
      pp["Wih0"], pp["Whh0"], pp["b0g"], pp["Wcat1"], pp["b1g"],
      pp["Wfp"], pp["bfp"])

    return out.reshape(B, T, OPAD)[:, :, :num_classes]      # (B, T, 5)


# --------------------------- pure-JAX reference ------------------------------
def reference_forward(x_btf, params):
    B, T, F = x_btf.shape
    E = params["W1"].shape[1]

    z = x_btf @ params["Wb"] + params["bb"]                 # (B, T, L)
    h = z @ params["W1"] + params["b1"]                     # (B, T, E)
    mean = h.mean(axis=0, keepdims=True)                    # per-timestep stats over B
    var = ((h - mean) ** 2).mean(axis=0, keepdims=True)
    hn = (h - mean) / jnp.sqrt(var + 1e-5) * params["gamma"] + params["beta"]
    e = jnp.where(hn > 0, hn, jnp.exp(hn) - 1.0)
    emb = e @ params["W2"] + params["b2"]                   # (B, T, E)

    def cell(x, hh, cc, wih, whh, b):
        g = x @ wih + hh @ whh + b
        i = jax.nn.sigmoid(g[:, :E])
        f = jax.nn.sigmoid(g[:, E:2 * E])
        gg = jnp.tanh(g[:, 2 * E:3 * E])
        o = jax.nn.sigmoid(g[:, 3 * E:])
        c_new = f * cc + i * gg
        return o * jnp.tanh(c_new), c_new

    h0 = c0 = h1 = c1 = jnp.zeros((T, E), jnp.float32)
    ys = []
    for s in range(B):                                      # seq axis = B, batch = T
        h0, c0 = cell(emb[s], h0, c0, params["Wih0"], params["Whh0"], params["blstm0"])
        h1, c1 = cell(h0, h1, c1, params["Wih1"], params["Whh1"], params["blstm1"])
        ys.append(h1)
    y = jnp.stack(ys, axis=0)                               # (B, T, E)
    return y @ params["Wf"] + params["bf"]                  # (B, T, 5)


# --------------------------------- main --------------------------------------
if __name__ == "__main__":
    B, T, F = 4, 8, 32          # batch, temporal context length (mult. of 8), feat
    L, E, O = 64, 32, 5         # backbone_final_length, embed_dim, num classes

    key = jax.random.PRNGKey(0)
    ks = jax.random.split(key, 16)
    nrm = lambda k, shape, s=0.1: (s * jax.random.normal(k, shape)).astype(jnp.float32)

    params = {
        # synthetic frozen backbone: Linear(F, L)
        "Wb": nrm(ks[0], (F, L)), "bb": nrm(ks[1], (1, L)),
        # embed_layer
        "W1": nrm(ks[2], (L, E)), "b1": nrm(ks[3], (1, E)),
        "gamma": jnp.ones((1, E), jnp.float32), "beta": jnp.zeros((1, E), jnp.float32),
        "W2": nrm(ks[4], (E, E)), "b2": nrm(ks[5], (1, E)),
        # LSTM layer 0 / 1  (gate order i, f, g, o; bias = b_ih + b_hh combined)
        "Wih0": nrm(ks[6], (E, 4 * E)), "Whh0": nrm(ks[7], (E, 4 * E)),
        "blstm0": nrm(ks[8], (1, 4 * E)),
        "Wih1": nrm(ks[9], (E, 4 * E)), "Whh1": nrm(ks[10], (E, 4 * E)),
        "blstm1": nrm(ks[11], (1, 4 * E)),
        # final fc
        "Wf": nrm(ks[12], (E, O)), "bf": nrm(ks[13], (1, O)),
    }

    x = jax.random.normal(ks[14], (B, T, F), dtype=jnp.float32)

    # one-time weight preprocessing (hoisted out of the hot path)
    prepped, num_classes = prepare_params(params)
    prepped = jax.tree_util.tree_map(jax.block_until_ready, prepped)

    fwd = jax.jit(lstm_tcm_forward, static_argnames=("num_classes",))
    out = jax.block_until_ready(fwd(x, prepped, num_classes=num_classes))
    ref = jax.block_until_ready(reference_forward(x, params))

    assert out.shape == (B, T, O), out.shape
    assert jnp.allclose(out, ref, atol=5e-3, rtol=5e-3), float(jnp.max(jnp.abs(out - ref)))
    print("KERNEL_OK")
</pallas_src>

<mosaic_0001>
module attributes {stable_mosaic.version = 11 : i64} {
  func.func @_fused_kernel(%arg0: i32, %arg1: memref<4x8x32xf32, #tpu.memory_space<vmem>>, %arg2: memref<32x32xf32, #tpu.memory_space<vmem>>, %arg3: memref<1x32xf32, #tpu.memory_space<vmem>>, %arg4: memref<1x32xf32, #tpu.memory_space<vmem>>, %arg5: memref<1x32xf32, #tpu.memory_space<vmem>>, %arg6: memref<32x32xf32, #tpu.memory_space<vmem>>, %arg7: memref<1x32xf32, #tpu.memory_space<vmem>>, %arg8: memref<32x128xf32, #tpu.memory_space<vmem>>, %arg9: memref<32x128xf32, #tpu.memory_space<vmem>>, %arg10: memref<1x128xf32, #tpu.memory_space<vmem>>, %arg11: memref<64x128xf32, #tpu.memory_space<vmem>>, %arg12: memref<1x128xf32, #tpu.memory_space<vmem>>, %arg13: memref<32x128xf32, #tpu.memory_space<vmem>>, %arg14: memref<1x128xf32, #tpu.memory_space<vmem>>, %arg15: memref<32x128xf32, #tpu.memory_space<vmem>>) attributes {dimension_semantics = [#tpu.dimension_semantics<arbitrary>], iteration_bounds = array<i64: 1>, scalar_prefetch = 0 : i64, scratch_operands = 0 : i64, tpu.core_type = #tpu.core_type<tc>, window_params = [{pipeline_mode = #tpu.pipeline_mode<synchronous>, transform_indices = @transform_0, window_bounds = array<i64: 4, 8, 32>}, {pipeline_mode = #tpu.pipeline_mode<synchronous>, transform_indices = @transform_1, window_bounds = array<i64: 32, 32>}, {pipeline_mode = #tpu.pipeline_mode<synchronous>, transform_indices = @transform_2, window_bounds = array<i64: 1, 32>}, {pipeline_mode = #tpu.pipeline_mode<synchronous>, transform_indices = @transform_3, window_bounds = array<i64: 1, 32>}, {pipeline_mode = #tpu.pipeline_mode<synchronous>, transform_indices = @transform_4, window_bounds = array<i64: 1, 32>}, {pipeline_mode = #tpu.pipeline_mode<synchronous>, transform_indices = @transform_5, window_bounds = array<i64: 32, 32>}, {pipeline_mode = #tpu.pipeline_mode<synchronous>, transform_indices = @transform_6, window_bounds = array<i64: 1, 32>}, {pipeline_mode = #tpu.pipeline_mode<synchronous>, transform_indices = @transform_7, window_bounds = array<i64: 32, 128>}, {pipeline_mode = #tpu.pipeline_mode<synchronous>, transform_indices = @transform_8, window_bounds = array<i64: 32, 128>}, {pipeline_mode = #tpu.pipeline_mode<synchronous>, transform_indices = @transform_9, window_bounds = array<i64: 1, 128>}, {pipeline_mode = #tpu.pipeline_mode<synchronous>, transform_indices = @transform_10, window_bounds = array<i64: 64, 128>}, {pipeline_mode = #tpu.pipeline_mode<synchronous>, transform_indices = @transform_11, window_bounds = array<i64: 1, 128>}, {pipeline_mode = #tpu.pipeline_mode<synchronous>, transform_indices = @transform_12, window_bounds = array<i64: 32, 128>}, {pipeline_mode = #tpu.pipeline_mode<synchronous>, transform_indices = @transform_13, window_bounds = array<i64: 1, 128>}, {pipeline_mode = #tpu.pipeline_mode<synchronous>, transform_indices = @transform_14, window_bounds = array<i64: 32, 128>}]} {
    %c0 = arith.constant 0 : index
    %c0_0 = arith.constant 0 : index
    %c0_1 = arith.constant 0 : index
    %0 = vector.load %arg1[%c0, %c0_0, %c0_1] : memref<4x8x32xf32, #tpu.memory_space<vmem>>, vector<4x8x32xf32>
    %1 = vector.shape_cast %0 : vector<4x8x32xf32> to vector<32x32xf32>
    %c0_2 = arith.constant 0 : index
    %c0_3 = arith.constant 0 : index
    %2 = vector.load %arg2[%c0_2, %c0_3] : memref<32x32xf32, #tpu.memory_space<vmem>>, vector<32x32xf32>
    %cst = arith.constant dense<0.000000e+00> : vector<32x32xf32>
    %3 = tpu.matmul %1, %2, %cst {dimension_numbers = #tpu.dot_dimension_numbers<[1], [0], [0], [1], [0, 0, 1, 1], [], []>} : vector<32x32xf32>, vector<32x32xf32>, vector<32x32xf32> -> vector<32x32xf32>
    %c0_4 = arith.constant 0 : index
    %c0_5 = arith.constant 0 : index
    %4 = vector.load %arg3[%c0_4, %c0_5] : memref<1x32xf32, #tpu.memory_space<vmem>>, vector<1x32xf32>
    %5 = vector.broadcast %4 : vector<1x32xf32> to vector<32x32xf32>
    %6 = arith.addf %3, %5 : vector<32x32xf32>
    %7 = vector.shape_cast %6 : vector<32x32xf32> to vector<4x8x32xf32>
    %cst_6 = arith.constant dense<0.000000e+00> : vector<8x32xf32>
    %8 = vector.multi_reduction <add>, %7, %cst_6 [0] : vector<4x8x32xf32> to vector<8x32xf32>
    %9 = vector.shape_cast %8 : vector<8x32xf32> to vector<1x8x32xf32>
    %cst_7 = arith.constant 4.000000e+00 : f32
    %10 = vector.broadcast %cst_7 : f32 to vector<1x8x32xf32>
    %11 = arith.divf %9, %10 : vector<1x8x32xf32>
    %12 = vector.broadcast %11 : vector<1x8x32xf32> to vector<4x8x32xf32>
    %13 = arith.subf %7, %12 : vector<4x8x32xf32>
    %14 = arith.mulf %13, %13 : vector<4x8x32xf32>
    %cst_8 = arith.constant dense<0.000000e+00> : vector<8x32xf32>
    %15 = vector.multi_reduction <add>, %14, %cst_8 [0] : vector<4x8x32xf32> to vector<8x32xf32>
    %16 = vector.shape_cast %15 : vector<8x32xf32> to vector<1x8x32xf32>
    %cst_9 = arith.constant 4.000000e+00 : f32
    %17 = vector.broadcast %cst_9 : f32 to vector<1x8x32xf32>
    %18 = arith.divf %16, %17 : vector<1x8x32xf32>
    %19 = vector.broadcast %11 : vector<1x8x32xf32> to vector<4x8x32xf32>
    %20 = arith.subf %7, %19 : vector<4x8x32xf32>
    %cst_10 = arith.constant 9.99999974E-6 : f32
    %21 = vector.broadcast %cst_10 : f32 to vector<1x8x32xf32>
    %22 = arith.addf %18, %21 : vector<1x8x32xf32>
    %23 = math.rsqrt %22 : vector<1x8x32xf32>
    %24 = vector.broadcast %23 : vector<1x8x32xf32> to vector<4x8x32xf32>
    %25 = arith.mulf %20, %24 : vector<4x8x32xf32>
    %c0_11 = arith.constant 0 : index
    %c0_12 = arith.constant 0 : index
    %26 = vector.load %arg4[%c0_11, %c0_12] : memref<1x32xf32, #tpu.memory_space<vmem>>, vector<1x32xf32>
    %27 = vector.shape_cast %26 : vector<1x32xf32> to vector<1x1x32xf32>
    %28 = vector.broadcast %27 : vector<1x1x32xf32> to vector<4x8x32xf32>
    %29 = arith.mulf %25, %28 : vector<4x8x32xf32>
    %c0_13 = arith.constant 0 : index
    %c0_14 = arith.constant 0 : index
    %30 = vector.load %arg5[%c0_13, %c0_14] : memref<1x32xf32, #tpu.memory_space<vmem>>, vector<1x32xf32>
    %31 = vector.shape_cast %30 : vector<1x32xf32> to vector<1x1x32xf32>
    %32 = vector.broadcast %31 : vector<1x1x32xf32> to vector<4x8x32xf32>
    %33 = arith.addf %29, %32 : vector<4x8x32xf32>
    %cst_15 = arith.constant 0.000000e+00 : f32
    %34 = vector.broadcast %cst_15 : f32 to vector<4x8x32xf32>
    %35 = arith.cmpf ogt, %33, %34 : vector<4x8x32xf32>
    %cst_16 = arith.constant 0.000000e+00 : f32
    %36 = vector.broadcast %cst_16 : f32 to vector<4x8x32xf32>
    %37 = arith.minimumf %33, %36 : vector<4x8x32xf32>
    %38 = math.exp %37 : vector<4x8x32xf32>
    %cst_17 = arith.constant 1.000000e+00 : f32
    %39 = vector.broadcast %cst_17 : f32 to vector<4x8x32xf32>
    %40 = arith.subf %38, %39 : vector<4x8x32xf32>
    %41 = arith.select %35, %33, %40 : vector<4x8x32xi1>, vector<4x8x32xf32>
    %42 = vector.shape_cast %41 : vector<4x8x32xf32> to vector<32x32xf32>
    %c0_18 = arith.constant 0 : index
    %c0_19 = arith.constant 0 : index
    %43 = vector.load %arg6[%c0_18, %c0_19] : memref<32x32xf32, #tpu.memory_space<vmem>>, vector<32x32xf32>
    %cst_20 = arith.constant dense<0.000000e+00> : vector<32x32xf32>
    %44 = tpu.matmul %42, %43, %cst_20 {dimension_numbers = #tpu.dot_dimension_numbers<[1], [0], [0], [1], [0, 0, 1, 1], [], []>} : vector<32x32xf32>, vector<32x32xf32>, vector<32x32xf32> -> vector<32x32xf32>
    %c0_21 = arith.constant 0 : index
    %c0_22 = arith.constant 0 : index
    %45 = vector.load %arg7[%c0_21, %c0_22] : memref<1x32xf32, #tpu.memory_space<vmem>>, vector<1x32xf32>
    %46 = vector.broadcast %45 : vector<1x32xf32> to vector<32x32xf32>
    %47 = arith.addf %44, %46 : vector<32x32xf32>
    %c0_23 = arith.constant 0 : index
    %c0_24 = arith.constant 0 : index
    %48 = vector.load %arg8[%c0_23, %c0_24] : memref<32x128xf32, #tpu.memory_space<vmem>>, vector<32x128xf32>
    %cst_25 = arith.constant dense<0.000000e+00> : vector<32x128xf32>
    %49 = tpu.matmul %47, %48, %cst_25 {dimension_numbers = #tpu.dot_dimension_numbers<[1], [0], [0], [1], [0, 0, 1, 1], [], []>} : vector<32x32xf32>, vector<32x128xf32>, vector<32x128xf32> -> vector<32x128xf32>
    %c0_26 = arith.constant 0 : index
    %c0_27 = arith.constant 0 : index
    %50 = vector.load %arg10[%c0_26, %c0_27] : memref<1x128xf32, #tpu.memory_space<vmem>>, vector<1x128xf32>
    %51 = vector.broadcast %50 : vector<1x128xf32> to vector<32x128xf32>
    %52 = arith.addf %49, %51 : vector<32x128xf32>
    %53 = vector.shape_cast %52 : vector<32x128xf32> to vector<4x8x128xf32>
    %cst_28 = arith.constant 0.000000e+00 : f32
    %54 = vector.broadcast %cst_28 : f32 to vector<8x32xf32>
    %55 = vector.extract_strided_slice %53 {offsets = [0, 0, 0], sizes = [1, 8, 128], strides = [1, 1, 1]} : vector<4x8x128xf32> to vector<1x8x128xf32>
    %56 = vector.shape_cast %55 : vector<1x8x128xf32> to vector<8x128xf32>
    %c0_29 = arith.constant 0 : index
    %c0_30 = arith.constant 0 : index
    %57 = vector.load %arg9[%c0_29, %c0_30] : memref<32x128xf32, #tpu.memory_space<vmem>>, vector<32x128xf32>
    %cst_31 = arith.constant dense<0.000000e+00> : vector<8x128xf32>
    %58 = tpu.matmul %54, %57, %cst_31 {dimension_numbers = #tpu.dot_dimension_numbers<[1], [0], [0], [1], [0, 0, 1, 1], [], []>} : vector<8x32xf32>, vector<32x128xf32>, vector<8x128xf32> -> vector<8x128xf32>
    %59 = arith.addf %56, %58 : vector<8x128xf32>
    %60 = arith.negf %59 : vector<8x128xf32>
    %61 = math.exp %60 : vector<8x128xf32>
    %cst_32 = arith.constant 1.000000e+00 : f32
    %62 = vector.broadcast %cst_32 : f32 to vector<8x128xf32>
    %63 = arith.addf %62, %61 : vector<8x128xf32>
    %64 = arith.divf %62, %63 : vector<8x128xf32>
    %65 = vector.extract_strided_slice %64 {offsets = [0, 0], sizes = [8, 32], strides = [1, 1]} : vector<8x128xf32> to vector<8x32xf32>
    %66 = vector.extract_strided_slice %64 {offsets = [0, 32], sizes = [8, 32], strides = [1, 1]} : vector<8x128xf32> to vector<8x32xf32>
    %67 = vector.extract_strided_slice %64 {offsets = [0, 64], sizes = [8, 32], strides = [1, 1]} : vector<8x128xf32> to vector<8x32xf32>
    %cst_33 = arith.constant 2.000000e+00 : f32
    %68 = vector.broadcast %cst_33 : f32 to vector<8x32xf32>
    %69 = arith.mulf %68, %67 : vector<8x32xf32>
    %cst_34 = arith.constant 1.000000e+00 : f32
    %70 = vector.broadcast %cst_34 : f32 to vector<8x32xf32>
    %71 = arith.subf %69, %70 : vector<8x32xf32>
    %72 = vector.extract_strided_slice %64 {offsets = [0, 96], sizes = [8, 32], strides = [1, 1]} : vector<8x128xf32> to vector<8x32xf32>
    %73 = arith.mulf %66, %54 : vector<8x32xf32>
    %74 = arith.mulf %65, %71 : vector<8x32xf32>
    %75 = arith.addf %73, %74 : vector<8x32xf32>
    %76 = math.tanh %75 : vector<8x32xf32>
    %77 = arith.mulf %72, %76 : vector<8x32xf32>
    %78 = tpu.concatenate %77, %54 in 1 : vector<8x32xf32>, vector<8x32xf32> -> vector<8x64xf32>
    %c0_35 = arith.constant 0 : index
    %c0_36 = arith.constant 0 : index
    %79 = vector.load %arg11[%c0_35, %c0_36] : memref<64x128xf32, #tpu.memory_space<vmem>>, vector<64x128xf32>
    %cst_37 = arith.constant dense<0.000000e+00> : vector<8x128xf32>
    %80 = tpu.matmul %78, %79, %cst_37 {dimension_numbers = #tpu.dot_dimension_numbers<[1], [0], [0], [1], [0, 0, 1, 1], [], []>} : vector<8x64xf32>, vector<64x128xf32>, vector<8x128xf32> -> vector<8x128xf32>
    %c0_38 = arith.constant 0 : index
    %c0_39 = arith.constant 0 : index
    %81 = vector.load %arg12[%c0_38, %c0_39] : memref<1x128xf32, #tpu.memory_space<vmem>>, vector<1x128xf32>
    %82 = vector.broadcast %81 : vector<1x128xf32> to vector<8x128xf32>
    %83 = arith.addf %80, %82 : vector<8x128xf32>
    %84 = vector.extract_strided_slice %53 {offsets = [1, 0, 0], sizes = [1, 8, 128], strides = [1, 1, 1]} : vector<4x8x128xf32> to vector<1x8x128xf32>
    %85 = vector.shape_cast %84 : vector<1x8x128xf32> to vector<8x128xf32>
    %c0_40 = arith.constant 0 : index
    %c0_41 = arith.constant 0 : index
    %86 = vector.load %arg9[%c0_40, %c0_41] : memref<32x128xf32, #tpu.memory_space<vmem>>, vector<32x128xf32>
    %cst_42 = arith.constant dense<0.000000e+00> : vector<8x128xf32>
    %87 = tpu.matmul %77, %86, %cst_42 {dimension_numbers = #tpu.dot_dimension_numbers<[1], [0], [0], [1], [0, 0, 1, 1], [], []>} : vector<8x32xf32>, vector<32x128xf32>, vector<8x128xf32> -> vector<8x128xf32>
    %88 = arith.addf %85, %87 : vector<8x128xf32>
    %89 = arith.negf %83 : vector<8x128xf32>
    %90 = math.exp %89 : vector<8x128xf32>
    %cst_43 = arith.constant 1.000000e+00 : f32
    %91 = vector.broadcast %cst_43 : f32 to vector<8x128xf32>
    %92 = arith.addf %91, %90 : vector<8x128xf32>
    %93 = arith.divf %91, %92 : vector<8x128xf32>
    %94 = vector.extract_strided_slice %93 {offsets = [0, 0], sizes = [8, 32], strides = [1, 1]} : vector<8x128xf32> to vector<8x32xf32>
    %95 = vector.extract_strided_slice %93 {offsets = [0, 32], sizes = [8, 32], strides = [1, 1]} : vector<8x128xf32> to vector<8x32xf32>
    %96 = vector.extract_strided_slice %93 {offsets = [0, 64], sizes = [8, 32], strides = [1, 1]} : vector<8x128xf32> to vector<8x32xf32>
    %cst_44 = arith.constant 2.000000e+00 : f32
    %97 = vector.broadcast %cst_44 : f32 to vector<8x32xf32>
    %98 = arith.mulf %97, %96 : vector<8x32xf32>
    %cst_45 = arith.constant 1.000000e+00 : f32
    %99 = vector.broadcast %cst_45 : f32 to vector<8x32xf32>
    %100 = arith.subf %98, %99 : vector<8x32xf32>
    %101 = vector.extract_strided_slice %93 {offsets = [0, 96], sizes = [8, 32], strides = [1, 1]} : vector<8x128xf32> to vector<8x32xf32>
    %102 = arith.mulf %95, %54 : vector<8x32xf32>
    %103 = arith.mulf %94, %100 : vector<8x32xf32>
    %104 = arith.addf %102, %103 : vector<8x32xf32>
    %105 = math.tanh %104 : vector<8x32xf32>
    %106 = arith.mulf %101, %105 : vector<8x32xf32>
    %c0_46 = arith.constant 0 : index
    %c0_47 = arith.constant 0 : index
    %107 = vector.load %arg13[%c0_46, %c0_47] : memref<32x128xf32, #tpu.memory_space<vmem>>, vector<32x128xf32>
    %cst_48 = arith.constant dense<0.000000e+00> : vector<8x128xf32>
    %108 = tpu.matmul %106, %107, %cst_48 {dimension_numbers = #tpu.dot_dimension_numbers<[1], [0], [0], [1], [0, 0, 1, 1], [], []>} : vector<8x32xf32>, vector<32x128xf32>, vector<8x128xf32> -> vector<8x128xf32>
    %c0_49 = arith.constant 0 : index
    %c0_50 = arith.constant 0 : index
    %109 = vector.load %arg14[%c0_49, %c0_50] : memref<1x128xf32, #tpu.memory_space<vmem>>, vector<1x128xf32>
    %110 = vector.broadcast %109 : vector<1x128xf32> to vector<8x128xf32>
    %111 = arith.addf %108, %110 : vector<8x128xf32>
    %c0_51 = arith.constant 0 : index
    %c0_52 = arith.constant 0 : index
    %112 = vector.load %arg15[%c0_51, %c0_52] : memref<32x128xf32, #tpu.memory_space<vmem>>, vector<8x128xf32>
    tpu.vector_store %arg15[%c0_51, %c0_52], %111 {strides = array<i32>} : memref<32x128xf32, #tpu.memory_space<vmem>>, vector<8x128xf32>,
    %113 = arith.negf %88 : vector<8x128xf32>
    %114 = math.exp %113 : vector<8x128xf32>
    %cst_53 = arith.constant 1.000000e+00 : f32
    %115 = vector.broadcast %cst_53 : f32 to vector<8x128xf32>
    %116 = arith.addf %115, %114 : vector<8x128xf32>
    %117 = arith.divf %115, %116 : vector<8x128xf32>
    %118 = vector.extract_strided_slice %117 {offsets = [0, 0], sizes = [8, 32], strides = [1, 1]} : vector<8x128xf32> to vector<8x32xf32>
    %119 = vector.extract_strided_slice %117 {offsets = [0, 32], sizes = [8, 32], strides = [1, 1]} : vector<8x128xf32> to vector<8x32xf32>
    %120 = vector.extract_strided_slice %117 {offsets = [0, 64], sizes = [8, 32], strides = [1, 1]} : vector<8x128xf32> to vector<8x32xf32>
    %cst_54 = arith.constant 2.000000e+00 : f32
    %121 = vector.broadcast %cst_54 : f32 to vector<8x32xf32>
    %122 = arith.mulf %121, %120 : vector<8x32xf32>
    %cst_55 = arith.constant 1.000000e+00 : f32
    %123 = vector.broadcast %cst_55 : f32 to vector<8x32xf32>
    %124 = arith.subf %122, %123 : vector<8x32xf32>
    %125 = vector.extract_strided_slice %117 {offsets = [0, 96], sizes = [8, 32], strides = [1, 1]} : vector<8x128xf32> to vector<8x32xf32>
    %126 = arith.mulf %119, %75 : vector<8x32xf32>
    %127 = arith.mulf %118, %124 : vector<8x32xf32>
    %128 = arith.addf %126, %127 : vector<8x32xf32>
    %129 = math.tanh %128 : vector<8x32xf32>
    %130 = arith.mulf %125, %129 : vector<8x32xf32>
    %131 = tpu.concatenate %130, %106 in 1 : vector<8x32xf32>, vector<8x32xf32> -> vector<8x64xf32>
    %c0_56 = arith.constant 0 : index
    %c0_57 = arith.constant 0 : index
    %132 = vector.load %arg11[%c0_56, %c0_57] : memref<64x128xf32, #tpu.memory_space<vmem>>, vector<64x128xf32>
    %cst_58 = arith.constant dense<0.000000e+00> : vector<8x128xf32>
    %133 = tpu.matmul %131, %132, %cst_58 {dimension_numbers = #tpu.dot_dimension_numbers<[1], [0], [0], [1], [0, 0, 1, 1], [], []>} : vector<8x64xf32>, vector<64x128xf32>, vector<8x128xf32> -> vector<8x128xf32>
    %c0_59 = arith.constant 0 : index
    %c0_60 = arith.constant 0 : index
    %134 = vector.load %arg12[%c0_59, %c0_60] : memref<1x128xf32, #tpu.memory_space<vmem>>, vector<1x128xf32>
    %135 = vector.broadcast %134 : vector<1x128xf32> to vector<8x128xf32>
    %136 = arith.addf %133, %135 : vector<8x128xf32>
    %137 = vector.extract_strided_slice %53 {offsets = [2, 0, 0], sizes = [1, 8, 128], strides = [1, 1, 1]} : vector<4x8x128xf32> to vector<1x8x128xf32>
    %138 = vector.shape_cast %137 : vector<1x8x128xf32> to vector<8x128xf32>
    %c0_61 = arith.constant 0 : index
    %c0_62 = arith.constant 0 : index
    %139 = vector.load %arg9[%c0_61, %c0_62] : memref<32x128xf32, #tpu.memory_space<vmem>>, vector<32x128xf32>
    %cst_63 = arith.constant dense<0.000000e+00> : vector<8x128xf32>
    %140 = tpu.matmul %130, %139, %cst_63 {dimension_numbers = #tpu.dot_dimension_numbers<[1], [0], [0], [1], [0, 0, 1, 1], [], []>} : vector<8x32xf32>, vector<32x128xf32>, vector<8x128xf32> -> vector<8x128xf32>
    %141 = arith.addf %138, %140 : vector<8x128xf32>
    %142 = arith.negf %136 : vector<8x128xf32>
    %143 = math.exp %142 : vector<8x128xf32>
    %cst_64 = arith.constant 1.000000e+00 : f32
    %144 = vector.broadcast %cst_64 : f32 to vector<8x128xf32>
    %145 = arith.addf %144, %143 : vector<8x128xf32>
    %146 = arith.divf %144, %145 : vector<8x128xf32>
    %147 = vector.extract_strided_slice %146 {offsets = [0, 0], sizes = [8, 32], strides = [1, 1]} : vector<8x128xf32> to vector<8x32xf32>
    %148 = vector.extract_strided_slice %146 {offsets = [0, 32], sizes = [8, 32], strides = [1, 1]} : vector<8x128xf32> to vector<8x32xf32>
    %149 = vector.extract_strided_slice %146 {offsets = [0, 64], sizes = [8, 32], strides = [1, 1]} : vector<8x128xf32> to vector<8x32xf32>
    %cst_65 = arith.constant 2.000000e+00 : f32
    %150 = vector.broadcast %cst_65 : f32 to vector<8x32xf32>
    %151 = arith.mulf %150, %149 : vector<8x32xf32>
    %cst_66 = arith.constant 1.000000e+00 : f32
    %152 = vector.broadcast %cst_66 : f32 to vector<8x32xf32>
    %153 = arith.subf %151, %152 : vector<8x32xf32>
    %154 = vector.extract_strided_slice %146 {offsets = [0, 96], sizes = [8, 32], strides = [1, 1]} : vector<8x128xf32> to vector<8x32xf32>
    %155 = arith.mulf %148, %104 : vector<8x32xf32>
    %156 = arith.mulf %147, %153 : vector<8x32xf32>
    %157 = arith.addf %155, %156 : vector<8x32xf32>
    %158 = math.tanh %157 : vector<8x32xf32>
    %159 = arith.mulf %154, %158 : vector<8x32xf32>
    %c0_67 = arith.constant 0 : index
    %c0_68 = arith.constant 0 : index
    %160 = vector.load %arg13[%c0_67, %c0_68] : memref<32x128xf32, #tpu.memory_space<vmem>>, vector<32x128xf32>
    %cst_69 = arith.constant dense<0.000000e+00> : vector<8x128xf32>
    %161 = tpu.matmul %159, %160, %cst_69 {dimension_numbers = #tpu.dot_dimension_numbers<[1], [0], [0], [1], [0, 0, 1, 1], [], []>} : vector<8x32xf32>, vector<32x128xf32>, vector<8x128xf32> -> vector<8x128xf32>
    %c0_70 = arith.constant 0 : index
    %c0_71 = arith.constant 0 : index
    %162 = vector.load %arg14[%c0_70, %c0_71] : memref<1x128xf32, #tpu.memory_space<vmem>>, vector<1x128xf32>
    %163 = vector.broadcast %162 : vector<1x128xf32> to vector<8x128xf32>
    %164 = arith.addf %161, %163 : vector<8x128xf32>
    %c8 = arith.constant 8 : index
    %c0_72 = arith.constant 0 : index
    %165 = vector.load %arg15[%c8, %c0_72] : memref<32x128xf32, #tpu.memory_space<vmem>>, vector<8x128xf32>
    tpu.vector_store %arg15[%c8, %c0_72], %164 {strides = array<i32>} : memref<32x128xf32, #tpu.memory_space<vmem>>, vector<8x128xf32>,
    %166 = arith.negf %141 : vector<8x128xf32>
    %167 = math.exp %166 : vector<8x128xf32>
    %cst_73 = arith.constant 1.000000e+00 : f32
    %168 = vector.broadcast %cst_73 : f32 to vector<8x128xf32>
    %169 = arith.addf %168, %167 : vector<8x128xf32>
    %170 = arith.divf %168, %169 : vector<8x128xf32>
    %171 = vector.extract_strided_slice %170 {offsets = [0, 0], sizes = [8, 32], strides = [1, 1]} : vector<8x128xf32> to vector<8x32xf32>
    %172 = vector.extract_strided_slice %170 {offsets = [0, 32], sizes = [8, 32], strides = [1, 1]} : vector<8x128xf32> to vector<8x32xf32>
    %173 = vector.extract_strided_slice %170 {offsets = [0, 64], sizes = [8, 32], strides = [1, 1]} : vector<8x128xf32> to vector<8x32xf32>
    %cst_74 = arith.constant 2.000000e+00 : f32
    %174 = vector.broadcast %cst_74 : f32 to vector<8x32xf32>
    %175 = arith.mulf %174, %173 : vector<8x32xf32>
    %cst_75 = arith.constant 1.000000e+00 : f32
    %176 = vector.broadcast %cst_75 : f32 to vector<8x32xf32>
    %177 = arith.subf %175, %176 : vector<8x32xf32>
    %178 = vector.extract_strided_slice %170 {offsets = [0, 96], sizes = [8, 32], strides = [1, 1]} : vector<8x128xf32> to vector<8x32xf32>
    %179 = arith.mulf %172, %128 : vector<8x32xf32>
    %180 = arith.mulf %171, %177 : vector<8x32xf32>
    %181 = arith.addf %179, %180 : vector<8x32xf32>
    %182 = math.tanh %181 : vector<8x32xf32>
    %183 = arith.mulf %178, %182 : vector<8x32xf32>
    %184 = tpu.concatenate %183, %159 in 1 : vector<8x32xf32>, vector<8x32xf32> -> vector<8x64xf32>
    %c0_76 = arith.constant 0 : index
    %c0_77 = arith.constant 0 : index
    %185 = vector.load %arg11[%c0_76, %c0_77] : memref<64x128xf32, #tpu.memory_space<vmem>>, vector<64x128xf32>
    %cst_78 = arith.constant dense<0.000000e+00> : vector<8x128xf32>
    %186 = tpu.matmul %184, %185, %cst_78 {dimension_numbers = #tpu.dot_dimension_numbers<[1], [0], [0], [1], [0, 0, 1, 1], [], []>} : vector<8x64xf32>, vector<64x128xf32>, vector<8x128xf32> -> vector<8x128xf32>
    %c0_79 = arith.constant 0 : index
    %c0_80 = arith.constant 0 : index
    %187 = vector.load %arg12[%c0_79, %c0_80] : memref<1x128xf32, #tpu.memory_space<vmem>>, vector<1x128xf32>
    %188 = vector.broadcast %187 : vector<1x128xf32> to vector<8x128xf32>
    %189 = arith.addf %186, %188 : vector<8x128xf32>
    %190 = vector.extract_strided_slice %53 {offsets = [3, 0, 0], sizes = [1, 8, 128], strides = [1, 1, 1]} : vector<4x8x128xf32> to vector<1x8x128xf32>
    %191 = vector.shape_cast %190 : vector<1x8x128xf32> to vector<8x128xf32>
    %c0_81 = arith.constant 0 : index
    %c0_82 = arith.constant 0 : index
    %192 = vector.load %arg9[%c0_81, %c0_82] : memref<32x128xf32, #tpu.memory_space<vmem>>, vector<32x128xf32>
    %cst_83 = arith.constant dense<0.000000e+00> : vector<8x128xf32>
    %193 = tpu.matmul %183, %192, %cst_83 {dimension_numbers = #tpu.dot_dimension_numbers<[1], [0], [0], [1], [0, 0, 1, 1], [], []>} : vector<8x32xf32>, vector<32x128xf32>, vector<8x128xf32> -> vector<8x128xf32>
    %194 = arith.addf %191, %193 : vector<8x128xf32>
    %195 = arith.negf %189 : vector<8x128xf32>
    %196 = math.exp %195 : vector<8x128xf32>
    %cst_84 = arith.constant 1.000000e+00 : f32
    %197 = vector.broadcast %cst_84 : f32 to vector<8x128xf32>
    %198 = arith.addf %197, %196 : vector<8x128xf32>
    %199 = arith.divf %197, %198 : vector<8x128xf32>
    %200 = vector.extract_strided_slice %199 {offsets = [0, 0], sizes = [8, 32], strides = [1, 1]} : vector<8x128xf32> to vector<8x32xf32>
    %201 = vector.extract_strided_slice %199 {offsets = [0, 32], sizes = [8, 32], strides = [1, 1]} : vector<8x128xf32> to vector<8x32xf32>
    %202 = vector.extract_strided_slice %199 {offsets = [0, 64], sizes = [8, 32], strides = [1, 1]} : vector<8x128xf32> to vector<8x32xf32>
    %cst_85 = arith.constant 2.000000e+00 : f32
    %203 = vector.broadcast %cst_85 : f32 to vector<8x32xf32>
    %204 = arith.mulf %203, %202 : vector<8x32xf32>
    %cst_86 = arith.constant 1.000000e+00 : f32
    %205 = vector.broadcast %cst_86 : f32 to vector<8x32xf32>
    %206 = arith.subf %204, %205 : vector<8x32xf32>
    %207 = vector.extract_strided_slice %199 {offsets = [0, 96], sizes = [8, 32], strides = [1, 1]} : vector<8x128xf32> to vector<8x32xf32>
    %208 = arith.mulf %201, %157 : vector<8x32xf32>
    %209 = arith.mulf %200, %206 : vector<8x32xf32>
    %210 = arith.addf %208, %209 : vector<8x32xf32>
    %211 = math.tanh %210 : vector<8x32xf32>
    %212 = arith.mulf %207, %211 : vector<8x32xf32>
    %c0_87 = arith.constant 0 : index
    %c0_88 = arith.constant 0 : index
    %213 = vector.load %arg13[%c0_87, %c0_88] : memref<32x128xf32, #tpu.memory_space<vmem>>, vector<32x128xf32>
    %cst_89 = arith.constant dense<0.000000e+00> : vector<8x128xf32>
    %214 = tpu.matmul %212, %213, %cst_89 {dimension_numbers = #tpu.dot_dimension_numbers<[1], [0], [0], [1], [0, 0, 1, 1], [], []>} : vector<8x32xf32>, vector<32x128xf32>, vector<8x128xf32> -> vector<8x128xf32>
    %c0_90 = arith.constant 0 : index
    %c0_91 = arith.constant 0 : index
    %215 = vector.load %arg14[%c0_90, %c0_91] : memref<1x128xf32, #tpu.memory_space<vmem>>, vector<1x128xf32>
    %216 = vector.broadcast %215 : vector<1x128xf32> to vector<8x128xf32>
    %217 = arith.addf %214, %216 : vector<8x128xf32>
    %c16 = arith.constant 16 : index
    %c0_92 = arith.constant 0 : index
    %218 = vector.load %arg15[%c16, %c0_92] : memref<32x128xf32, #tpu.memory_space<vmem>>, vector<8x128xf32>
    tpu.vector_store %arg15[%c16, %c0_92], %217 {strides = array<i32>} : memref<32x128xf32, #tpu.memory_space<vmem>>, vector<8x128xf32>,
    %219 = arith.negf %194 : vector<8x128xf32>
    %220 = math.exp %219 : vector<8x128xf32>
    %cst_93 = arith.constant 1.000000e+00 : f32
    %221 = vector.broadcast %cst_93 : f32 to vector<8x128xf32>
    %222 = arith.addf %221, %220 : vector<8x128xf32>
    %223 = arith.divf %221, %222 : vector<8x128xf32>
    %224 = vector.extract_strided_slice %223 {offsets = [0, 0], sizes = [8, 32], strides = [1, 1]} : vector<8x128xf32> to vector<8x32xf32>
    %225 = vector.extract_strided_slice %223 {offsets = [0, 32], sizes = [8, 32], strides = [1, 1]} : vector<8x128xf32> to vector<8x32xf32>
    %226 = vector.extract_strided_slice %223 {offsets = [0, 64], sizes = [8, 32], strides = [1, 1]} : vector<8x128xf32> to vector<8x32xf32>
    %cst_94 = arith.constant 2.000000e+00 : f32
    %227 = vector.broadcast %cst_94 : f32 to vector<8x32xf32>
    %228 = arith.mulf %227, %226 : vector<8x32xf32>
    %cst_95 = arith.constant 1.000000e+00 : f32
    %229 = vector.broadcast %cst_95 : f32 to vector<8x32xf32>
    %230 = arith.subf %228, %229 : vector<8x32xf32>
    %231 = vector.extract_strided_slice %223 {offsets = [0, 96], sizes = [8, 32], strides = [1, 1]} : vector<8x128xf32> to vector<8x32xf32>
    %232 = arith.mulf %225, %181 : vector<8x32xf32>
    %233 = arith.mulf %224, %230 : vector<8x32xf32>
    %234 = arith.addf %232, %233 : vector<8x32xf32>
    %235 = math.tanh %234 : vector<8x32xf32>
    %236 = arith.mulf %231, %235 : vector<8x32xf32>
    %237 = tpu.concatenate %236, %212 in 1 : vector<8x32xf32>, vector<8x32xf32> -> vector<8x64xf32>
    %c0_96 = arith.constant 0 : index
    %c0_97 = arith.constant 0 : index
    %238 = vector.load %arg11[%c0_96, %c0_97] : memref<64x128xf32, #tpu.memory_space<vmem>>, vector<64x128xf32>
    %cst_98 = arith.constant dense<0.000000e+00> : vector<8x128xf32>
    %239 = tpu.matmul %237, %238, %cst_98 {dimension_numbers = #tpu.dot_dimension_numbers<[1], [0], [0], [1], [0, 0, 1, 1], [], []>} : vector<8x64xf32>, vector<64x128xf32>, vector<8x128xf32> -> vector<8x128xf32>
    %c0_99 = arith.constant 0 : index
    %c0_100 = arith.constant 0 : index
    %240 = vector.load %arg12[%c0_99, %c0_100] : memref<1x128xf32, #tpu.memory_space<vmem>>, vector<1x128xf32>
    %241 = vector.broadcast %240 : vector<1x128xf32> to vector<8x128xf32>
    %242 = arith.addf %239, %241 : vector<8x128xf32>
    %243 = arith.negf %242 : vector<8x128xf32>
    %244 = math.exp %243 : vector<8x128xf32>
    %cst_101 = arith.constant 1.000000e+00 : f32
    %245 = vector.broadcast %cst_101 : f32 to vector<8x128xf32>
    %246 = arith.addf %245, %244 : vector<8x128xf32>
    %247 = arith.divf %245, %246 : vector<8x128xf32>
    %248 = vector.extract_strided_slice %247 {offsets = [0, 0], sizes = [8, 32], strides = [1, 1]} : vector<8x128xf32> to vector<8x32xf32>
    %249 = vector.extract_strided_slice %247 {offsets = [0, 32], sizes = [8, 32], strides = [1, 1]} : vector<8x128xf32> to vector<8x32xf32>
    %250 = vector.extract_strided_slice %247 {offsets = [0, 64], sizes = [8, 32], strides = [1, 1]} : vector<8x128xf32> to vector<8x32xf32>
    %cst_102 = arith.constant 2.000000e+00 : f32
    %251 = vector.broadcast %cst_102 : f32 to vector<8x32xf32>
    %252 = arith.mulf %251, %250 : vector<8x32xf32>
    %cst_103 = arith.constant 1.000000e+00 : f32
    %253 = vector.broadcast %cst_103 : f32 to vector<8x32xf32>
    %254 = arith.subf %252, %253 : vector<8x32xf32>
    %255 = vector.extract_strided_slice %247 {offsets = [0, 96], sizes = [8, 32], strides = [1, 1]} : vector<8x128xf32> to vector<8x32xf32>
    %256 = arith.mulf %249, %210 : vector<8x32xf32>
    %257 = arith.mulf %248, %254 : vector<8x32xf32>
    %258 = arith.addf %256, %257 : vector<8x32xf32>
    %259 = math.tanh %258 : vector<8x32xf32>
    %260 = arith.mulf %255, %259 : vector<8x32xf32>
    %c0_104 = arith.constant 0 : index
    %c0_105 = arith.constant 0 : index
    %261 = vector.load %arg13[%c0_104, %c0_105] : memref<32x128xf32, #tpu.memory_space<vmem>>, vector<32x128xf32>
    %cst_106 = arith.constant dense<0.000000e+00> : vector<8x128xf32>
    %262 = tpu.matmul %260, %261, %cst_106 {dimension_numbers = #tpu.dot_dimension_numbers<[1], [0], [0], [1], [0, 0, 1, 1], [], []>} : vector<8x32xf32>, vector<32x128xf32>, vector<8x128xf32> -> vector<8x128xf32>
    %c0_107 = arith.constant 0 : index
    %c0_108 = arith.constant 0 : index
    %263 = vector.load %arg14[%c0_107, %c0_108] : memref<1x128xf32, #tpu.memory_space<vmem>>, vector<1x128xf32>
    %264 = vector.broadcast %263 : vector<1x128xf32> to vector<8x128xf32>
    %265 = arith.addf %262, %264 : vector<8x128xf32>
    %c24 = arith.constant 24 : index
    %c0_109 = arith.constant 0 : index
    %266 = vector.load %arg15[%c24, %c0_109] : memref<32x128xf32, #tpu.memory_space<vmem>>, vector<8x128xf32>
    tpu.vector_store %arg15[%c24, %c0_109], %265 {strides = array<i32>} : memref<32x128xf32, #tpu.memory_space<vmem>>, vector<8x128xf32>,
    return
  }
  func.func @transform_0(%arg0: i32) -> (i32, i32, i32) {
    %c0_i32 = arith.constant 0 : i32
    %c0_i32_0 = arith.constant 0 : i32
    %c0_i32_1 = arith.constant 0 : i32
    %c0_i32_2 = arith.constant 0 : i32
    return %c0_i32, %c0_i32_0, %c0_i32_1 : i32, i32, i32
  }
  func.func @transform_1(%arg0: i32) -> (i32, i32) {
    %c0_i32 = arith.constant 0 : i32
    %c0_i32_0 = arith.constant 0 : i32
    %c0_i32_1 = arith.constant 0 : i32
    return %c0_i32, %c0_i32_0 : i32, i32
  }
  func.func @transform_2(%arg0: i32) -> (i32, i32) {
    %c0_i32 = arith.constant 0 : i32
    %c0_i32_0 = arith.constant 0 : i32
    %c0_i32_1 = arith.constant 0 : i32
    return %c0_i32, %c0_i32_0 : i32, i32
  }
  func.func @transform_3(%arg0: i32) -> (i32, i32) {
    %c0_i32 = arith.constant 0 : i32
    %c0_i32_0 = arith.constant 0 : i32
    %c0_i32_1 = arith.constant 0 : i32
    return %c0_i32, %c0_i32_0 : i32, i32
  }
  func.func @transform_4(%arg0: i32) -> (i32, i32) {
    %c0_i32 = arith.constant 0 : i32
    %c0_i32_0 = arith.constant 0 : i32
    %c0_i32_1 = arith.constant 0 : i32
    return %c0_i32, %c0_i32_0 : i32, i32
  }
  func.func @transform_5(%arg0: i32) -> (i32, i32) {
    %c0_i32 = arith.constant 0 : i32
    %c0_i32_0 = arith.constant 0 : i32
    %c0_i32_1 = arith.constant 0 : i32
    return %c0_i32, %c0_i32_0 : i32, i32
  }
  func.func @transform_6(%arg0: i32) -> (i32, i32) {
    %c0_i32 = arith.constant 0 : i32
    %c0_i32_0 = arith.constant 0 : i32
    %c0_i32_1 = arith.constant 0 : i32
    return %c0_i32, %c0_i32_0 : i32, i32
  }
  func.func @transform_7(%arg0: i32) -> (i32, i32) {
    %c0_i32 = arith.constant 0 : i32
    %c0_i32_0 = arith.constant 0 : i32
    %c0_i32_1 = arith.constant 0 : i32
    return %c0_i32, %c0_i32_0 : i32, i32
  }
  func.func @transform_8(%arg0: i32) -> (i32, i32) {
    %c0_i32 = arith.constant 0 : i32
    %c0_i32_0 = arith.constant 0 : i32
    %c0_i32_1 = arith.constant 0 : i32
    return %c0_i32, %c0_i32_0 : i32, i32
  }
  func.func @transform_9(%arg0: i32) -> (i32, i32) {
    %c0_i32 = arith.constant 0 : i32
    %c0_i32_0 = arith.constant 0 : i32
    %c0_i32_1 = arith.constant 0 : i32
    return %c0_i32, %c0_i32_0 : i32, i32
  }
  func.func @transform_10(%arg0: i32) -> (i32, i32) {
    %c0_i32 = arith.constant 0 : i32
    %c0_i32_0 = arith.constant 0 : i32
    %c0_i32_1 = arith.constant 0 : i32
    return %c0_i32, %c0_i32_0 : i32, i32
  }
  func.func @transform_11(%arg0: i32) -> (i32, i32) {
    %c0_i32 = arith.constant 0 : i32
    %c0_i32_0 = arith.constant 0 : i32
    %c0_i32_1 = arith.constant 0 : i32
    return %c0_i32, %c0_i32_0 : i32, i32
  }
  func.func @transform_12(%arg0: i32) -> (i32, i32) {
    %c0_i32 = arith.constant 0 : i32
    %c0_i32_0 = arith.constant 0 : i32
    %c0_i32_1 = arith.constant 0 : i32
    return %c0_i32, %c0_i32_0 : i32, i32
  }
  func.func @transform_13(%arg0: i32) -> (i32, i32) {
    %c0_i32 = arith.constant 0 : i32
    %c0_i32_0 = arith.constant 0 : i32
    %c0_i32_1 = arith.constant 0 : i32
    return %c0_i32, %c0_i32_0 : i32, i32
  }
  func.func @transform_14(%arg0: i32) -> (i32, i32) {
    %c0_i32 = arith.constant 0 : i32
    %c0_i32_0 = arith.constant 0 : i32
    %c0_i32_1 = arith.constant 0 : i32
    return %c0_i32, %c0_i32_0 : i32, i32
  }
}

</mosaic_0001>

<llo_original>
// kernel: lstm_tcm_forward.1
$region0: #{lstm_tcm_forward.1}
  #allocation0 [shape = 'u32[]', space=smem, size = 0x4, offset = 0x4, fixed_abs, tag = 'smem constant byte address 0x4 - core index']
  #allocation1 [shape = 'u32[144,128]{1,0:T(1,128)}', space=vmem, size = 0x12000, scoped, tag = 'internal scratch']
  %s0 = inlined_call_operand.hbm [shape: f32[4,8,32], index: 0, kind: input, shape index: {}]
  %s1 = inlined_call_operand.hbm [shape: f32[32,32], index: 1, kind: input, shape index: {}]
  %s2 = inlined_call_operand.vmem [shape: f32[1,32], index: 2, kind: input, shape index: {}]
  %s3 = inlined_call_operand.vmem [shape: f32[1,32], index: 3, kind: input, shape index: {}]
  %s4 = inlined_call_operand.vmem [shape: f32[1,32], index: 4, kind: input, shape index: {}]
  %s5 = inlined_call_operand.hbm [shape: f32[32,32], index: 5, kind: input, shape index: {}]
  %s6 = inlined_call_operand.vmem [shape: f32[1,32], index: 6, kind: input, shape index: {}]
  %s7 = inlined_call_operand.hbm [shape: f32[32,128], index: 7, kind: input, shape index: {}]
  %s8 = inlined_call_operand.hbm [shape: f32[32,128], index: 8, kind: input, shape index: {}]
  %s9 = inlined_call_operand.vmem [shape: f32[1,128], index: 9, kind: input, shape index: {}]
  %s10 = inlined_call_operand.hbm [shape: f32[64,128], index: 10, kind: input, shape index: {}]
  %s11 = inlined_call_operand.vmem [shape: f32[1,128], index: 11, kind: input, shape index: {}]
  %s12 = inlined_call_operand.hbm [shape: f32[32,128], index: 12, kind: input, shape index: {}]
  %s13 = inlined_call_operand.vmem [shape: f32[1,128], index: 13, kind: input, shape index: {}]
  %s14 = inlined_call_operand.vmem [shape: f32[32,128], index: 14, kind: output, shape index: {}]
  %s15 = sld [smem:[#allocation0]]
  $region94: #{lstm_tcm_forward.1} parent=0
    _
  %s17 = ssub.s32 1, %s15
  %s18 = scalar_select 0, %s17, %s15
  $region1: #{lstm_tcm_forward.1} parent=0
    #allocation2 [shape = 'u8[16384]{0}', space=vmem, size = 0x4000, scoped, tag = 'input window, operand 0, single buffered']
    #allocation3 [shape = 's32[1]{0}', space=sflag, size = 0x4, scoped, tag = 'scoped memory for lstm_tcm_forward.1']
    #allocation4 [shape = 'u8[16384]{0}', space=vmem, size = 0x4000, scoped, tag = 'input window, operand 1, single buffered']
    #allocation5 [shape = 's32[1]{0}', space=sflag, size = 0x4, scoped, tag = 'scoped memory for lstm_tcm_forward.1']
    #allocation6 [shape = 'u8[16384]{0}', space=vmem, size = 0x4000, scoped, tag = 'input window, operand 5, single buffered']
    #allocation7 [shape = 'u8[16384]{0}', space=vmem, size = 0x4000, scoped, tag = 'input window, operand 7, single buffered']
    #allocation8 [shape = 's32[1]{0}', space=sflag, size = 0x4, scoped, tag = 'scoped memory for lstm_tcm_forward.1']
    #allocation9 [shape = 'u8[16384]{0}', space=vmem, size = 0x4000, scoped, tag = 'input window, operand 8, single buffered']
    #allocation10 [shape = 'u8[32768]{0}', space=vmem, size = 0x8000, scoped, tag = 'input window, operand 10, single buffered']
    #allocation11 [shape = 's32[1]{0}', space=sflag, size = 0x4, scoped, tag = 'scoped memory for lstm_tcm_forward.1']
    #allocation12 [shape = 'u8[16384]{0}', space=vmem, size = 0x4000, scoped, tag = 'input window, operand 12, single buffered']
    %19 = vsyncpa [#allocation3], 0
    %20 = vsyncpa [#allocation5], 0
    %21 = vsyncpa [#allocation8], 0
    %22 = vsyncpa [#allocation11], 0
    // Predicated region
    $region2: #{lstm_tcm_forward.1} parent=1 // pred_check
      _
    $region3: #{lstm_tcm_forward.1} parent=1 // pred_check_branch
      %24 = sbr.rel (0) target = $region5
    $region4: #{lstm_tcm_forward.1} parent=1 // pred_region
      %s26 = ssub.s32 512, 512
      %27 = vsyncadd [#allocation3], %s26
      %s28 = sshll.u32 [#allocation2], 4
      %s29 = int_to_ptr.vmem [resolvable:$true] %s28
      %34 = dma.hbm_to_vmem [thread:$0]  %s0, 512, %s29, [#allocation3], 128, 128, 8
    $region5: #{lstm_tcm_forward.1} parent=1 // pred_fallthru
      _
    // Predicated region
    $region6: #{lstm_tcm_forward.1} parent=1 // pred_check
      _
    $region7: #{lstm_tcm_forward.1} parent=1 // pred_check_branch
      %36 = sbr.rel (0) target = $region9
    $region8: #{lstm_tcm_forward.1} parent=1 // pred_region
      %s38 = ssub.s32 512, 512
      %39 = vsyncadd [#allocation5], %s38
      %s40 = sshll.u32 [#allocation4], 4
      %s41 = int_to_ptr.vmem [resolvable:$true] %s40
      %46 = dma.hbm_to_vmem [thread:$0]  %s1, 512, %s41, [#allocation5], 128, 128, 8
    $region9: #{lstm_tcm_forward.1} parent=1 // pred_fallthru
      _
    // Predicated region
    $region10: #{lstm_tcm_forward.1} parent=1 // pred_check
      _
    $region11: #{lstm_tcm_forward.1} parent=1 // pred_check_branch
      %48 = sbr.rel (0) target = $region13
    $region12: #{lstm_tcm_forward.1} parent=1 // pred_region
      _
    $region13: #{lstm_tcm_forward.1} parent=1 // pred_fallthru
      _
    // Predicated region
    $region14: #{lstm_tcm_forward.1} parent=1 // pred_check
      _
    $region15: #{lstm_tcm_forward.1} parent=1 // pred_check_branch
      %50 = sbr.rel (0) target = $region17
    $region16: #{lstm_tcm_forward.1} parent=1 // pred_region
      _
    $region17: #{lstm_tcm_forward.1} parent=1 // pred_fallthru
      _
    // Predicated region
    $region18: #{lstm_tcm_forward.1} parent=1 // pred_check
      _
    $region19: #{lstm_tcm_forward.1} parent=1 // pred_check_branch
      %52 = sbr.rel (0) target = $region21
    $region20: #{lstm_tcm_forward.1} parent=1 // pred_region
      _
    $region21: #{lstm_tcm_forward.1} parent=1 // pred_fallthru
      _
    // Predicated region
    $region22: #{lstm_tcm_forward.1} parent=1 // pred_check
      _
    $region23: #{lstm_tcm_forward.1} parent=1 // pred_check_branch
      %54 = sbr.rel (0) target = $region25
    $region24: #{lstm_tcm_forward.1} parent=1 // pred_region
      %s56 = ssub.s32 512, 512
      %57 = vsyncadd [#allocation5], %s56
      %s58 = sshll.u32 [#allocation6], 4
      %s59 = int_to_ptr.vmem [resolvable:$true] %s58
      %64 = dma.hbm_to_vmem [thread:$0]  %s5, 512, %s59, [#allocation5], 128, 128, 8
    $region25: #{lstm_tcm_forward.1} parent=1 // pred_fallthru
      _
    // Predicated region
    $region26: #{lstm_tcm_forward.1} parent=1 // pred_check
      _
    $region27: #{lstm_tcm_forward.1} parent=1 // pred_check_branch
      %66 = sbr.rel (0) target = $region29
    $region28: #{lstm_tcm_forward.1} parent=1 // pred_region
      _
    $region29: #{lstm_tcm_forward.1} parent=1 // pred_fallthru
      _
    // Predicated region
    $region30: #{lstm_tcm_forward.1} parent=1 // pred_check
      _
    $region31: #{lstm_tcm_forward.1} parent=1 // pred_check_branch
      %68 = sbr.rel (0) target = $region33
    $region32: #{lstm_tcm_forward.1} parent=1 // pred_region
      %s70 = ssub.s32 512, 512
      %71 = vsyncadd [#allocation8], %s70
      %s72 = sshll.u32 [#allocation7], 4
      %s73 = int_to_ptr.vmem [resolvable:$true] %s72
      %78 = dma.hbm_to_vmem [thread:$0]  %s7, 512, %s73, [#allocation8], 128, 128, 8
    $region33: #{lstm_tcm_forward.1} parent=1 // pred_fallthru
      _
    // Predicated region
    $region34: #{lstm_tcm_forward.1} parent=1 // pred_check
      _
    $region35: #{lstm_tcm_forward.1} parent=1 // pred_check_branch
      %80 = sbr.rel (0) target = $region37
    $region36: #{lstm_tcm_forward.1} parent=1 // pred_region
      %s82 = ssub.s32 512, 512
      %83 = vsyncadd [#allocation8], %s82
      %s84 = sshll.u32 [#allocation9], 4
      %s85 = int_to_ptr.vmem [resolvable:$true] %s84
      %90 = dma.hbm_to_vmem [thread:$0]  %s8, 512, %s85, [#allocation8], 128, 128, 8
    $region37: #{lstm_tcm_forward.1} parent=1 // pred_fallthru
      _
    // Predicated region
    $region38: #{lstm_tcm_forward.1} parent=1 // pred_check
      _
    $region39: #{lstm_tcm_forward.1} parent=1 // pred_check_branch
      %92 = sbr.rel (0) target = $region41
    $region40: #{lstm_tcm_forward.1} parent=1 // pred_region
      _
    $region41: #{lstm_tcm_forward.1} parent=1 // pred_fallthru
      _
    // Predicated region
    $region42: #{lstm_tcm_forward.1} parent=1 // pred_check
      _
    $region43: #{lstm_tcm_forward.1} parent=1 // pred_check_branch
      %94 = sbr.rel (0) target = $region45
    $region44: #{lstm_tcm_forward.1} parent=1 // pred_region
      %s96 = ssub.s32 1024, 1024
      %97 = vsyncadd [#allocation11], %s96
      %s98 = sshll.u32 [#allocation10], 4
      %s99 = int_to_ptr.vmem [resolvable:$true] %s98
      %104 = dma.hbm_to_vmem [thread:$0]  %s10, 1024, %s99, [#allocation11], 128, 128, 8
    $region45: #{lstm_tcm_forward.1} parent=1 // pred_fallthru
      _
    // Predicated region
    $region46: #{lstm_tcm_forward.1} parent=1 // pred_check
      _
    $region47: #{lstm_tcm_forward.1} parent=1 // pred_check_branch
      %106 = sbr.rel (0) target = $region49
    $region48: #{lstm_tcm_forward.1} parent=1 // pred_region
      _
    $region49: #{lstm_tcm_forward.1} parent=1 // pred_fallthru
      _
    // Predicated region
    $region50: #{lstm_tcm_forward.1} parent=1 // pred_check
      _
    $region51: #{lstm_tcm_forward.1} parent=1 // pred_check_branch
      %108 = sbr.rel (0) target = $region53
    $region52: #{lstm_tcm_forward.1} parent=1 // pred_region
      %s110 = ssub.s32 512, 512
      %111 = vsyncadd [#allocation11], %s110
      %s112 = sshll.u32 [#allocation12], 4
      %s113 = int_to_ptr.vmem [resolvable:$true] %s112
      %118 = dma.hbm_to_vmem [thread:$0]  %s12, 512, %s113, [#allocation11], 128, 128, 8
    $region53: #{lstm_tcm_forward.1} parent=1 // pred_fallthru
      _
    // Predicated region
    $region54: #{lstm_tcm_forward.1} parent=1 // pred_check
      _
    $region55: #{lstm_tcm_forward.1} parent=1 // pred_check_branch
      %120 = sbr.rel (0) target = $region57
    $region56: #{lstm_tcm_forward.1} parent=1 // pred_region
      _
    $region57: #{lstm_tcm_forward.1} parent=1 // pred_fallthru
      _
    // Predicated region
    $region58: #{lstm_tcm_forward.1} parent=1 // pred_check
      _
    $region59: #{lstm_tcm_forward.1} parent=1 // pred_check_branch
      %122 = sbr.rel (0) target = $region61
    $region60: #{lstm_tcm_forward.1} parent=1 // pred_region
      %123 = dma.done [#allocation3], 512
    $region61: #{lstm_tcm_forward.1} parent=1 // pred_fallthru
      _
    // Predicated region
    $region62: #{lstm_tcm_forward.1} parent=1 // pred_check
      _
    $region63: #{lstm_tcm_forward.1} parent=1 // pred_check_branch
      %125 = sbr.rel (0) target = $region65
    $region64: #{lstm_tcm_forward.1} parent=1 // pred_region
      %126 = dma.done [#allocation5], 512
    $region65: #{lstm_tcm_forward.1} parent=1 // pred_fallthru
      _
    // Predicated region
    $region66: #{lstm_tcm_forward.1} parent=1 // pred_check
      _
    $region67: #{lstm_tcm_forward.1} parent=1 // pred_check_branch
      %128 = sbr.rel (0) target = $region69
    $region68: #{lstm_tcm_forward.1} parent=1 // pred_region
      %129 = dma.done [#allocation5], 512
    $region69: #{lstm_tcm_forward.1} parent=1 // pred_fallthru
      _
    // Predicated region
    $region70: #{lstm_tcm_forward.1} parent=1 // pred_check
      _
    $region71: #{lstm_tcm_forward.1} parent=1 // pred_check_branch
      %131 = sbr.rel (0) target = $region73
    $region72: #{lstm_tcm_forward.1} parent=1 // pred_region
      %132 = dma.done [#allocation8], 512
    $region73: #{lstm_tcm_forward.1} parent=1 // pred_fallthru
      _
    // Predicated region
    $region74: #{lstm_tcm_forward.1} parent=1 // pred_check
      _
    $region75: #{lstm_tcm_forward.1} parent=1 // pred_check_branch
      %134 = sbr.rel (0) target = $region77
    $region76: #{lstm_tcm_forward.1} parent=1 // pred_region
      %135 = dma.done [#allocation8], 512
    $region77: #{lstm_tcm_forward.1} parent=1 // pred_fallthru
      _
    // Predicated region
    $region78: #{lstm_tcm_forward.1} parent=1 // pred_check
      _
    $region79: #{lstm_tcm_forward.1} parent=1 // pred_check_branch
      %137 = sbr.rel (0) target = $region81
    $region80: #{lstm_tcm_forward.1} parent=1 // pred_region
      %138 = dma.done [#allocation11], 1024
    $region81: #{lstm_tcm_forward.1} parent=1 // pred_fallthru
      _
    // Predicated region
    $region82: #{lstm_tcm_forward.1} parent=1 // pred_check
      _
    $region83: #{lstm_tcm_forward.1} parent=1 // pred_check_branch
      %140 = sbr.rel (0) target = $region85
    $region84: #{lstm_tcm_forward.1} parent=1 // pred_region
      %141 = dma.done [#allocation11], 512
    $region85: #{lstm_tcm_forward.1} parent=1 // pred_fallthru
      _
    %v142 = vld [vmem:[#allocation2] sm:$0xff]
    %v143 = vld [vmem:[#allocation2 + $0x8] sm:$0xff]
    %v144 = vld [vmem:[#allocation2 + $0x10] sm:$0xff]
    %v145 = vld [vmem:[#allocation2 + $0x18] sm:$0xff]
    %v146 = vld [vmem:[#allocation4] sm:$0xff]
    %v147 = vld [vmem:[#allocation4 + $0x8] sm:$0xff]
    %v148 = vld [vmem:[#allocation4 + $0x10] sm:$0xff]
    %v149 = vld [vmem:[#allocation4 + $0x18] sm:$0xff]
    %v150 = vld [vmem:[%s2] sm:$0x1]
    %v152 = vlaneseq
    %v153 = vshrl.u32 %v152, 7
    %v154 = vsub.s32 0, %v153
    %v155 = vrot.slane %v150, %v154
    %vm157 = vcmask 261120
    %v159 = vsel %vm157, %v142, 0
    %v162 = vsel %vm157, %v143, 0
    %v165 = vsel %vm157, %v144, 0
    %v168 = vsel %vm157, %v145, 0
    %170 = vmatprep.subr.mxu0 0.0
    %171 = vmatpush1.msra.mxu0 %v146
    %172 = vmatprep.subr.mxu0 0.0
    %173 = vmatpush1.msra.mxu0 %v147
    %174 = vmatprep.subr.mxu0 0.0
    %175 = vmatpush1.msra.mxu0 %v148
    %176 = vmatprep.subr.mxu0 0.0
    %177 = vmatpush1.msra.mxu0 %v149
    %178 = vmatprep.subr.mxu0 0.0
    %179 = vmatpush1.msra.mxu0 0.0
    %180 = vmatprep.subr.mxu0 0.0
    %181 = vmatpush1.msra.mxu0 0.0
    %182 = vmatprep.subr.mxu0 0.0
    %183 = vmatpush1.msra.mxu0 0.0
    %184 = vmatprep.subr.mxu0 0.0
    %185 = vmatpush1.msra.mxu0 0.0
    %186 = vmatprep.subr.mxu0 0.0
    %187 = vmatpush1.msra.mxu0 0.0
    %188 = vmatprep.subr.mxu0 0.0
    %189 = vmatpush1.msra.mxu0 0.0
    %190 = vmatprep.subr.mxu0 0.0
    %191 = vmatpush1.msra.mxu0 0.0
    %192 = vmatprep.subr.mxu0 0.0
    %193 = vmatpush1.msra.mxu0 0.0
    %194 = vmatprep.subr.mxu0 0.0
    %195 = vmatpush1.msra.mxu0 0.0
    %196 = vmatprep.subr.mxu0 0.0
    %197 = vmatpush1.msra.mxu0 0.0
    %198 = vmatprep.subr.mxu0 0.0
    %199 = vmatpush1.msra.mxu0 0.0
    %200 = vmatprep.subr.mxu0 0.0
    %201 = vmatpush1.msra.mxu0 0.0
    %202 = vmatprep.subr.mxu0 0.0
    %203 = vmatpush1.msra.mxu0 0.0
    %204 = vmatprep.subr.mxu0 0.0
    %205 = vmatpush1.msra.mxu0 0.0
    %206 = vmatprep.subr.mxu0 0.0
    %207 = vmatpush1.msra.mxu0 0.0
    %208 = vmatprep.subr.mxu0 0.0
    %209 = vmatpush1.msra.mxu0 0.0
    %210 = vmatprep.subr.mxu0 0.0
    %211 = vmatpush1.msra.mxu0 0.0
    %212 = vmatprep.subr.mxu0 0.0
    %213 = vmatpush1.msra.mxu0 0.0
    %214 = vmatprep.subr.mxu0 0.0
    %215 = vmatpush1.msra.mxu0 0.0
    %216 = vmatprep.subr.mxu0 0.0
    %217 = vmatpush1.msra.mxu0 0.0
    %218 = vmatprep.subr.mxu0 0.0
    %219 = vmatpush1.msra.mxu0 0.0
    %220 = vmatprep.subr.mxu0 0.0
    %221 = vmatpush1.msra.mxu0 0.0
    %222 = vmatprep.subr.mxu0 0.0
    %223 = vmatpush1.msra.mxu0 0.0
    %224 = vmatprep.subr.mxu0 0.0
    %225 = vmatpush1.msra.mxu0 0.0
    %226 = vmatprep.subr.mxu0 0.0
    %227 = vmatpush1.msra.mxu0 0.0
    %228 = vmatprep.subr.mxu0 0.0
    %229 = vmatpush1.msra.mxu0 0.0
    %230 = vmatprep.subr.mxu0 0.0
    %231 = vmatpush1.msra.mxu0 0.0
    %232 = vmatprep.subr.mxu0 0.0
    %233 = vmatpush1.msra.mxu0 0.0
    %234 = vmatprep.mubr.f32.mxu0 0.0
    %235 = vmatmul.mubr.f32.gmra.mrb[0].mxu0 %v159
    %v236 = vpop.f32.mrb[0].mxu0
    %v237 = vadd.f32 %v155, %v236
    %v238 = vpop.f32.mrb[0].mxu0
    %239 = vmatprep.mubr.f32.mxu0 0.0
    %240 = vmatmul.mubr.f32.gmra.mrb[0].mxu0 %v162
    %v241 = vpop.f32.mrb[0].mxu0
    %v242 = vadd.f32 %v155, %v241
    %v243 = vpop.f32.mrb[0].mxu0
    %244 = vmatprep.mubr.f32.mxu0 0.0
    %245 = vmatmul.mubr.f32.gmra.mrb[0].mxu0 %v165
    %v246 = vpop.f32.mrb[0].mxu0
    %v247 = vadd.f32 %v155, %v246
    %v248 = vpop.f32.mrb[0].mxu0
    %249 = vmatprep.mubr.f32.mxu0 0.0
    %250 = vmatmul.mubr.f32.gmra.mrb[0].mxu0 %v168
    %v251 = vpop.f32.mrb[0].mxu0
    %v252 = vadd.f32 %v155, %v251
    %v253 = vpop.f32.mrb[0].mxu0
    %254 = vdwg.mxu0
    %v255 = vsel %vm157, %v237, 0.0
    %v256 = vsel %vm157, %v242, 0.0
    %v257 = vadd.f32 %v255, %v256
    %v258 = vsel %vm157, %v247, 0.0
    %v259 = vadd.f32 %v257, %v258
    %v260 = vsel %vm157, %v252, 0.0
    %v261 = vadd.f32 %v259, %v260
    %v262 = vrcp.pop 4.0
    %v263 = vmul.f32 %v261, %v262
    %v264 = vsub.f32 %v237, %v263
    %v265 = vsub.f32 %v242, %v263
    %v266 = vsub.f32 %v247, %v263
    %v267 = vsub.f32 %v252, %v263
    %v268 = vmul.f32 %v264, %v264
    %v269 = vmul.f32 %v265, %v265
    %v270 = vmul.f32 %v266, %v266
    %v271 = vmul.f32 %v267, %v267
    %v272 = vsel %vm157, %v268, 0.0
    %v273 = vsel %vm157, %v269, 0.0
    %v274 = vadd.f32 %v272, %v273
    %v275 = vsel %vm157, %v270, 0.0
    %v276 = vadd.f32 %v274, %v275
    %v277 = vsel %vm157, %v271, 0.0
    %v278 = vadd.f32 %v276, %v277
    %v279 = vmul.f32 %v278, %v262
    %v280 = vadd.f32 %v279, 1e-05
    %v281 = vrsqrt.pop %v280
    %v282 = vmul.f32 %v264, %v281
    %v283 = vmul.f32 %v265, %v281
    %v284 = vmul.f32 %v266, %v281
    %v285 = vmul.f32 %v267, %v281
    %v286 = vld [vmem:[%s3] sm:$0x1]
    %v288 = vlaneseq
    %v289 = vshrl.u32 %v288, 7
    %v290 = vsub.s32 0, %v289
    %v291 = vrot.slane %v286, %v290
    %v293 = vmul.f32 %v282, %v291
    %v294 = vmul.f32 %v283, %v291
    %v295 = vmul.f32 %v284, %v291
    %v296 = vmul.f32 %v285, %v291
    %v297 = vld [vmem:[%s4] sm:$0x1]
    %v299 = vlaneseq
    %v300 = vshrl.u32 %v299, 7
    %v301 = vsub.s32 0, %v300
    %v302 = vrot.slane %v297, %v301
    %v304 = vadd.f32 %v293, %v302
    %v305 = vadd.f32 %v294, %v302
    %v306 = vadd.f32 %v295, %v302
    %v307 = vadd.f32 %v296, %v302
    %vm308 = vcmp.gt.f32.partialorder %v304, 0.0
    %vm309 = vcmp.gt.f32.partialorder %v305, 0.0
    %vm310 = vcmp.gt.f32.partialorder %v306, 0.0
    %vm311 = vcmp.gt.f32.partialorder %v307, 0.0
    %v312 = vmin.f32 %v304, 0.0
    %v313 = vmin.f32 %v305, 0.0
    %v314 = vmin.f32 %v306, 0.0
    %v315 = vmin.f32 %v307, 0.0
    %v316 = vmul.f32 %v312, 1.442695
    %v317 = vpow.pop %v316
    %v318 = vmul.f32 %v313, 1.442695
    %v319 = vpow.pop %v318
    %v320 = vmul.f32 %v314, 1.442695
    %v321 = vpow.pop %v320
    %v322 = vmul.f32 %v315, 1.442695
    %v323 = vpow.pop %v322
    %v324 = vsub.f32 %v317, 1.0
    %v325 = vsub.f32 %v319, 1.0
    %v326 = vsub.f32 %v321, 1.0
    %v327 = vsub.f32 %v323, 1.0
    %v328 = vsel %vm308, %v304, %v324
    %v329 = vsel %vm309, %v305, %v325
    %v330 = vsel %vm310, %v306, %v326
    %v331 = vsel %vm311, %v307, %v327
    %v332 = vld [vmem:[#allocation6] sm:$0xff]
    %v333 = vld [vmem:[#allocation6 + $0x8] sm:$0xff]
    %v334 = vld [vmem:[#allocation6 + $0x10] sm:$0xff]
    %v335 = vld [vmem:[#allocation6 + $0x18] sm:$0xff]
    %v336 = vld [vmem:[%s6] sm:$0x1]
    %v338 = vlaneseq
    %v339 = vshrl.u32 %v338, 7
    %v340 = vsub.s32 0, %v339
    %v341 = vrot.slane %v336, %v340
    %v344 = vsel %vm157, %v328, 0
    %v347 = vsel %vm157, %v329, 0
    %v350 = vsel %vm157, %v330, 0
    %v353 = vsel %vm157, %v331, 0
    %355 = vmatprep.subr.mxu0 0.0
    %356 = vmatpush1.msra.mxu0 %v332
    %357 = vmatprep.subr.mxu0 0.0
    %358 = vmatpush1.msra.mxu0 %v333
    %359 = vmatprep.subr.mxu0 0.0
    %360 = vmatpush1.msra.mxu0 %v334
    %361 = vmatprep.subr.mxu0 0.0
    %362 = vmatpush1.msra.mxu0 %v335
    %363 = vmatprep.subr.mxu0 0.0
    %364 = vmatpush1.msra.mxu0 0.0
    %365 = vmatprep.subr.mxu0 0.0
    %366 = vmatpush1.msra.mxu0 0.0
    %367 = vmatprep.subr.mxu0 0.0
    %368 = vmatpush1.msra.mxu0 0.0
    %369 = vmatprep.subr.mxu0 0.0
    %370 = vmatpush1.msra.mxu0 0.0
    %371 = vmatprep.subr.mxu0 0.0
    %372 = vmatpush1.msra.mxu0 0.0
    %373 = vmatprep.subr.mxu0 0.0
    %374 = vmatpush1.msra.mxu0 0.0
    %375 = vmatprep.subr.mxu0 0.0
    %376 = vmatpush1.msra.mxu0 0.0
    %377 = vmatprep.subr.mxu0 0.0
    %378 = vmatpush1.msra.mxu0 0.0
    %379 = vmatprep.subr.mxu0 0.0
    %380 = vmatpush1.msra.mxu0 0.0
    %381 = vmatprep.subr.mxu0 0.0
    %382 = vmatpush1.msra.mxu0 0.0
    %383 = vmatprep.subr.mxu0 0.0
    %384 = vmatpush1.msra.mxu0 0.0
    %385 = vmatprep.subr.mxu0 0.0
    %386 = vmatpush1.msra.mxu0 0.0
    %387 = vmatprep.subr.mxu0 0.0
    %388 = vmatpush1.msra.mxu0 0.0
    %389 = vmatprep.subr.mxu0 0.0
    %390 = vmatpush1.msra.mxu0 0.0
    %391 = vmatprep.subr.mxu0 0.0
    %392 = vmatpush1.msra.mxu0 0.0
    %393 = vmatprep.subr.mxu0 0.0
    %394 = vmatpush1.msra.mxu0 0.0
    %395 = vmatprep.subr.mxu0 0.0
    %396 = vmatpush1.msra.mxu0 0.0
    %397 = vmatprep.subr.mxu0 0.0
    %398 = vmatpush1.msra.mxu0 0.0
    %399 = vmatprep.subr.mxu0 0.0
    %400 = vmatpush1.msra.mxu0 0.0
    %401 = vmatprep.subr.mxu0 0.0
    %402 = vmatpush1.msra.mxu0 0.0
    %403 = vmatprep.subr.mxu0 0.0
    %404 = vmatpush1.msra.mxu0 0.0
    %405 = vmatprep.subr.mxu0 0.0
    %406 = vmatpush1.msra.mxu0 0.0
    %407 = vmatprep.subr.mxu0 0.0
    %408 = vmatpush1.msra.mxu0 0.0
    %409 = vmatprep.subr.mxu0 0.0
    %410 = vmatpush1.msra.mxu0 0.0
    %411 = vmatprep.subr.mxu0 0.0
    %412 = vmatpush1.msra.mxu0 0.0
    %413 = vmatprep.subr.mxu0 0.0
    %414 = vmatpush1.msra.mxu0 0.0
    %415 = vmatprep.subr.mxu0 0.0
    %416 = vmatpush1.msra.mxu0 0.0
    %417 = vmatprep.subr.mxu0 0.0
    %418 = vmatpush1.msra.mxu0 0.0
    %419 = vmatprep.mubr.f32.mxu0 0.0
    %420 = vmatmul.mubr.f32.gmra.mrb[0].mxu0 %v344
    %v421 = vpop.f32.mrb[0].mxu0
    %v422 = vadd.f32 %v341, %v421
    %v423 = vpop.f32.mrb[0].mxu0
    %424 = vmatprep.mubr.f32.mxu0 0.0
    %425 = vmatmul.mubr.f32.gmra.mrb[0].mxu0 %v347
    %v426 = vpop.f32.mrb[0].mxu0
    %v427 = vadd.f32 %v341, %v426
    %v428 = vpop.f32.mrb[0].mxu0
    %429 = vmatprep.mubr.f32.mxu0 0.0
    %430 = vmatmul.mubr.f32.gmra.mrb[0].mxu0 %v350
    %v431 = vpop.f32.mrb[0].mxu0
    %v432 = vadd.f32 %v341, %v431
    %v433 = vpop.f32.mrb[0].mxu0
    %434 = vmatprep.mubr.f32.mxu0 0.0
    %435 = vmatmul.mubr.f32.gmra.mrb[0].mxu0 %v353
    %v436 = vpop.f32.mrb[0].mxu0
    %v437 = vadd.f32 %v341, %v436
    %v438 = vpop.f32.mrb[0].mxu0
    %439 = vdwg.mxu0
    %v440 = vld [vmem:[#allocation7] sm:$0xff]
    %v441 = vld [vmem:[#allocation7 + $0x8] sm:$0xff]
    %v442 = vld [vmem:[#allocation7 + $0x10] sm:$0xff]
    %v443 = vld [vmem:[#allocation7 + $0x18] sm:$0xff]
    %v444 = vld [vmem:[%s9] sm:$0x1]
    %v446 = vlaneseq
    %v447 = vshrl.u32 %v446, 7
    %v448 = vsub.s32 0, %v447
    %v449 = vrot.slane %v444, %v448
    %v452 = vsel %vm157, %v422, 0
    %v455 = vsel %vm157, %v427, 0
    %v458 = vsel %vm157, %v432, 0
    %v461 = vsel %vm157, %v437, 0
    %463 = vmatprep.subr.mxu0 0.0
    %464 = vmatpush1.msra.mxu0 %v440
    %465 = vmatprep.subr.mxu0 0.0
    %466 = vmatpush1.msra.mxu0 %v441
    %467 = vmatprep.subr.mxu0 0.0
    %468 = vmatpush1.msra.mxu0 %v442
    %469 = vmatprep.subr.mxu0 0.0
    %470 = vmatpush1.msra.mxu0 %v443
    %471 = vmatprep.subr.mxu0 0.0
    %472 = vmatpush1.msra.mxu0 0.0
    %473 = vmatprep.subr.mxu0 0.0
    %474 = vmatpush1.msra.mxu0 0.0
    %475 = vmatprep.subr.mxu0 0.0
    %476 = vmatpush1.msra.mxu0 0.0
    %477 = vmatprep.subr.mxu0 0.0
    %478 = vmatpush1.msra.mxu0 0.0
    %479 = vmatprep.subr.mxu0 0.0
    %480 = vmatpush1.msra.mxu0 0.0
    %481 = vmatprep.subr.mxu0 0.0
    %482 = vmatpush1.msra.mxu0 0.0
    %483 = vmatprep.subr.mxu0 0.0
    %484 = vmatpush1.msra.mxu0 0.0
    %485 = vmatprep.subr.mxu0 0.0
    %486 = vmatpush1.msra.mxu0 0.0
    %487 = vmatprep.subr.mxu0 0.0
    %488 = vmatpush1.msra.mxu0 0.0
    %489 = vmatprep.subr.mxu0 0.0
    %490 = vmatpush1.msra.mxu0 0.0
    %491 = vmatprep.subr.mxu0 0.0
    %492 = vmatpush1.msra.mxu0 0.0
    %493 = vmatprep.subr.mxu0 0.0
    %494 = vmatpush1.msra.mxu0 0.0
    %495 = vmatprep.subr.mxu0 0.0
    %496 = vmatpush1.msra.mxu0 0.0
    %497 = vmatprep.subr.mxu0 0.0
    %498 = vmatpush1.msra.mxu0 0.0
    %499 = vmatprep.subr.mxu0 0.0
    %500 = vmatpush1.msra.mxu0 0.0
    %501 = vmatprep.subr.mxu0 0.0
    %502 = vmatpush1.msra.mxu0 0.0
    %503 = vmatprep.subr.mxu0 0.0
    %504 = vmatpush1.msra.mxu0 0.0
    %505 = vmatprep.subr.mxu0 0.0
    %506 = vmatpush1.msra.mxu0 0.0
    %507 = vmatprep.subr.mxu0 0.0
    %508 = vmatpush1.msra.mxu0 0.0
    %509 = vmatprep.subr.mxu0 0.0
    %510 = vmatpush1.msra.mxu0 0.0
    %511 = vmatprep.subr.mxu0 0.0
    %512 = vmatpush1.msra.mxu0 0.0
    %513 = vmatprep.subr.mxu0 0.0
    %514 = vmatpush1.msra.mxu0 0.0
    %515 = vmatprep.subr.mxu0 0.0
    %516 = vmatpush1.msra.mxu0 0.0
    %517 = vmatprep.subr.mxu0 0.0
    %518 = vmatpush1.msra.mxu0 0.0
    %519 = vmatprep.subr.mxu0 0.0
    %520 = vmatpush1.msra.mxu0 0.0
    %521 = vmatprep.subr.mxu0 0.0
    %522 = vmatpush1.msra.mxu0 0.0
    %523 = vmatprep.subr.mxu0 0.0
    %524 = vmatpush1.msra.mxu0 0.0
    %525 = vmatprep.subr.mxu0 0.0
    %526 = vmatpush1.msra.mxu0 0.0
    %527 = vmatprep.mubr.f32.mxu0 0.0
    %528 = vmatmul.mubr.f32.gmra.mrb[0].mxu0 %v452
    %v529 = vpop.f32.mrb[0].mxu0
    %v530 = vadd.f32 %v449, %v529
    %v531 = vpop.f32.mrb[0].mxu0
    %532 = vmatprep.mubr.f32.mxu0 0.0
    %533 = vmatmul.mubr.f32.gmra.mrb[0].mxu0 %v455
    %v534 = vpop.f32.mrb[0].mxu0
    %v535 = vadd.f32 %v449, %v534
    %v536 = vpop.f32.mrb[0].mxu0
    %537 = vmatprep.mubr.f32.mxu0 0.0
    %538 = vmatmul.mubr.f32.gmra.mrb[0].mxu0 %v458
    %v539 = vpop.f32.mrb[0].mxu0
    %v540 = vadd.f32 %v449, %v539
    %v541 = vpop.f32.mrb[0].mxu0
    %542 = vmatprep.mubr.f32.mxu0 0.0
    %543 = vmatmul.mubr.f32.gmra.mrb[0].mxu0 %v461
    %v544 = vpop.f32.mrb[0].mxu0
    %v545 = vadd.f32 %v449, %v544
    %v546 = vpop.f32.mrb[0].mxu0
    %547 = vdwg.mxu0
    %v548 = vld [vmem:[#allocation9] sm:$0xff]
    %v549 = vld [vmem:[#allocation9 + $0x8] sm:$0xff]
    %v550 = vld [vmem:[#allocation9 + $0x10] sm:$0xff]
    %v551 = vld [vmem:[#allocation9 + $0x18] sm:$0xff]
    %v553 = vsel %vm157, 0.0, 0
    %555 = vmatprep.subr.mxu0 0.0
    %556 = vmatpush1.msra.mxu0 %v548
    %557 = vmatprep.subr.mxu0 0.0
    %558 = vmatpush1.msra.mxu0 %v549
    %559 = vmatprep.subr.mxu0 0.0
    %560 = vmatpush1.msra.mxu0 %v550
    %561 = vmatprep.subr.mxu0 0.0
    %562 = vmatpush1.msra.mxu0 %v551
    %563 = vmatprep.subr.mxu0 0.0
    %564 = vmatpush1.msra.mxu0 0.0
    %565 = vmatprep.subr.mxu0 0.0
    %566 = vmatpush1.msra.mxu0 0.0
    %567 = vmatprep.subr.mxu0 0.0
    %568 = vmatpush1.msra.mxu0 0.0
    %569 = vmatprep.subr.mxu0 0.0
    %570 = vmatpush1.msra.mxu0 0.0
    %571 = vmatprep.subr.mxu0 0.0
    %572 = vmatpush1.msra.mxu0 0.0
    %573 = vmatprep.subr.mxu0 0.0
    %574 = vmatpush1.msra.mxu0 0.0
    %575 = vmatprep.subr.mxu0 0.0
    %576 = vmatpush1.msra.mxu0 0.0
    %577 = vmatprep.subr.mxu0 0.0
    %578 = vmatpush1.msra.mxu0 0.0
    %579 = vmatprep.subr.mxu0 0.0
    %580 = vmatpush1.msra.mxu0 0.0
    %581 = vmatprep.subr.mxu0 0.0
    %582 = vmatpush1.msra.mxu0 0.0
    %583 = vmatprep.subr.mxu0 0.0
    %584 = vmatpush1.msra.mxu0 0.0
    %585 = vmatprep.subr.mxu0 0.0
    %586 = vmatpush1.msra.mxu0 0.0
    %587 = vmatprep.subr.mxu0 0.0
    %588 = vmatpush1.msra.mxu0 0.0
    %589 = vmatprep.subr.mxu0 0.0
    %590 = vmatpush1.msra.mxu0 0.0
    %591 = vmatprep.subr.mxu0 0.0
    %592 = vmatpush1.msra.mxu0 0.0
    %593 = vmatprep.subr.mxu0 0.0
    %594 = vmatpush1.msra.mxu0 0.0
    %595 = vmatprep.subr.mxu0 0.0
    %596 = vmatpush1.msra.mxu0 0.0
    %597 = vmatprep.subr.mxu0 0.0
    %598 = vmatpush1.msra.mxu0 0.0
    %599 = vmatprep.subr.mxu0 0.0
    %600 = vmatpush1.msra.mxu0 0.0
    %601 = vmatprep.subr.mxu0 0.0
    %602 = vmatpush1.msra.mxu0 0.0
    %603 = vmatprep.subr.mxu0 0.0
    %604 = vmatpush1.msra.mxu0 0.0
    %605 = vmatprep.subr.mxu0 0.0
    %606 = vmatpush1.msra.mxu0 0.0
    %607 = vmatprep.subr.mxu0 0.0
    %608 = vmatpush1.msra.mxu0 0.0
    %609 = vmatprep.subr.mxu0 0.0
    %610 = vmatpush1.msra.mxu0 0.0
    %611 = vmatprep.subr.mxu0 0.0
    %612 = vmatpush1.msra.mxu0 0.0
    %613 = vmatprep.subr.mxu0 0.0
    %614 = vmatpush1.msra.mxu0 0.0
    %615 = vmatprep.subr.mxu0 0.0
    %616 = vmatpush1.msra.mxu0 0.0
    %617 = vmatprep.subr.mxu0 0.0
    %618 = vmatpush1.msra.mxu0 0.0
    %619 = vmatprep.mubr.f32.mxu0 0.0
    %620 = vmatmul.mubr.f32.gmra.mrb[0].mxu0 %v553
    %v621 = vpop.f32.mrb[0].mxu0
    %v622 = vadd.f32 0.0, %v621
    %v623 = vpop.f32.mrb[0].mxu0
    %624 = vdwg.mxu0
    %v625 = vadd.f32 %v530, %v622
    %v626 = vxor.u32 %v625, 2147483648
    %v627 = vmul.f32 %v626, 1.442695
    %v628 = vpow.pop %v627
    %v629 = vadd.f32 %v628, 1.0
    %v630 = vrcp.pop %v629
    %v631 = vmul.f32 1.0, %v630
    %v632 = vmul.f32 %v631, 2.0
    %v633 = vsub.f32 %v632, 1.0
    %v634 = vmul.f32 %v631, 0.0
    %636 = vrot.lane.b32.xlu0 %v633, 64
    %v637 = vpop.permute.xlu0 %636
    %v639 = vmul.f32 %v631, %v637
    %641 = vrot.lane.b32.xlu0 %v639, 32
    %v642 = vpop.permute.xlu0 %641
    %v644 = vadd.f32 %v634, %v642
    %v645 = vtanh.pop %v644
    %647 = vrot.lane.b32.xlu0 %v645, 64
    %v648 = vpop.permute.xlu0 %647
    %v650 = vmul.f32 %v631, %v648
    %652 = vrot.lane.b32.xlu0 %v650, 32
    %v653 = vpop.permute.xlu0 %652
    %v655 = vsel %vm157, %v653, 0.0
    %v656 = vld [vmem:[#allocation10] sm:$0xff]
    %v657 = vld [vmem:[#allocation10 + $0x8] sm:$0xff]
    %v658 = vld [vmem:[#allocation10 + $0x10] sm:$0xff]
    %v659 = vld [vmem:[#allocation10 + $0x18] sm:$0xff]
    %v660 = vld [vmem:[#allocation10 + $0x20] sm:$0xff]
    %v661 = vld [vmem:[#allocation10 + $0x28] sm:$0xff]
    %v662 = vld [vmem:[#allocation10 + $0x30] sm:$0xff]
    %v663 = vld [vmem:[#allocation10 + $0x38] sm:$0xff]
    %v664 = vld [vmem:[%s11] sm:$0x1]
    %v666 = vlaneseq
    %v667 = vshrl.u32 %v666, 7
    %v668 = vsub.s32 0, %v667
    %v669 = vrot.slane %v664, %v668
    %vm671 = vcmask 523264
    %v673 = vsel %vm671, %v655, 0
    %675 = vmatprep.subr.mxu0 0.0
    %676 = vmatpush1.msra.mxu0 %v656
    %677 = vmatprep.subr.mxu0 0.0
    %678 = vmatpush1.msra.mxu0 %v657
    %679 = vmatprep.subr.mxu0 0.0
    %680 = vmatpush1.msra.mxu0 %v658
    %681 = vmatprep.subr.mxu0 0.0
    %682 = vmatpush1.msra.mxu0 %v659
    %683 = vmatprep.subr.mxu0 0.0
    %684 = vmatpush1.msra.mxu0 %v660
    %685 = vmatprep.subr.mxu0 0.0
    %686 = vmatpush1.msra.mxu0 %v661
    %687 = vmatprep.subr.mxu0 0.0
    %688 = vmatpush1.msra.mxu0 %v662
    %689 = vmatprep.subr.mxu0 0.0
    %690 = vmatpush1.msra.mxu0 %v663
    %691 = vmatprep.subr.mxu0 0.0
    %692 = vmatpush1.msra.mxu0 0.0
    %693 = vmatprep.subr.mxu0 0.0
    %694 = vmatpush1.msra.mxu0 0.0
    %695 = vmatprep.subr.mxu0 0.0
    %696 = vmatpush1.msra.mxu0 0.0
    %697 = vmatprep.subr.mxu0 0.0
    %698 = vmatpush1.msra.mxu0 0.0
    %699 = vmatprep.subr.mxu0 0.0
    %700 = vmatpush1.msra.mxu0 0.0
    %701 = vmatprep.subr.mxu0 0.0
    %702 = vmatpush1.msra.mxu0 0.0
    %703 = vmatprep.subr.mxu0 0.0
    %704 = vmatpush1.msra.mxu0 0.0
    %705 = vmatprep.subr.mxu0 0.0
    %706 = vmatpush1.msra.mxu0 0.0
    %707 = vmatprep.subr.mxu0 0.0
    %708 = vmatpush1.msra.mxu0 0.0
    %709 = vmatprep.subr.mxu0 0.0
    %710 = vmatpush1.msra.mxu0 0.0
    %711 = vmatprep.subr.mxu0 0.0
    %712 = vmatpush1.msra.mxu0 0.0
    %713 = vmatprep.subr.mxu0 0.0
    %714 = vmatpush1.msra.mxu0 0.0
    %715 = vmatprep.subr.mxu0 0.0
    %716 = vmatpush1.msra.mxu0 0.0
    %717 = vmatprep.subr.mxu0 0.0
    %718 = vmatpush1.msra.mxu0 0.0
    %719 = vmatprep.subr.mxu0 0.0
    %720 = vmatpush1.msra.mxu0 0.0
    %721 = vmatprep.subr.mxu0 0.0
    %722 = vmatpush1.msra.mxu0 0.0
    %723 = vmatprep.subr.mxu0 0.0
    %724 = vmatpush1.msra.mxu0 0.0
    %725 = vmatprep.subr.mxu0 0.0
    %726 = vmatpush1.msra.mxu0 0.0
    %727 = vmatprep.subr.mxu0 0.0
    %728 = vmatpush1.msra.mxu0 0.0
    %729 = vmatprep.subr.mxu0 0.0
    %730 = vmatpush1.msra.mxu0 0.0
    %731 = vmatprep.subr.mxu0 0.0
    %732 = vmatpush1.msra.mxu0 0.0
    %733 = vmatprep.subr.mxu0 0.0
    %734 = vmatpush1.msra.mxu0 0.0
    %735 = vmatprep.subr.mxu0 0.0
    %736 = vmatpush1.msra.mxu0 0.0
    %737 = vmatprep.subr.mxu0 0.0
    %738 = vmatpush1.msra.mxu0 0.0
    %739 = vmatprep.mubr.f32.mxu0 0.0
    %740 = vmatmul.mubr.f32.gmra.mrb[0].mxu0 %v673
    %v741 = vpop.f32.mrb[0].mxu0
    %v742 = vadd.f32 %v669, %v741
    %v743 = vpop.f32.mrb[0].mxu0
    %744 = vdwg.mxu0
    %v745 = vsel %vm157, %v653, 0
    %747 = vmatprep.subr.mxu0 0.0
    %748 = vmatpush1.msra.mxu0 %v548
    %749 = vmatprep.subr.mxu0 0.0
    %750 = vmatpush1.msra.mxu0 %v549
    %751 = vmatprep.subr.mxu0 0.0
    %752 = vmatpush1.msra.mxu0 %v550
    %753 = vmatprep.subr.mxu0 0.0
    %754 = vmatpush1.msra.mxu0 %v551
    %755 = vmatprep.subr.mxu0 0.0
    %756 = vmatpush1.msra.mxu0 0.0
    %757 = vmatprep.subr.mxu0 0.0
    %758 = vmatpush1.msra.mxu0 0.0
    %759 = vmatprep.subr.mxu0 0.0
    %760 = vmatpush1.msra.mxu0 0.0
    %761 = vmatprep.subr.mxu0 0.0
    %762 = vmatpush1.msra.mxu0 0.0
    %763 = vmatprep.subr.mxu0 0.0
    %764 = vmatpush1.msra.mxu0 0.0
    %765 = vmatprep.subr.mxu0 0.0
    %766 = vmatpush1.msra.mxu0 0.0
    %767 = vmatprep.subr.mxu0 0.0
    %768 = vmatpush1.msra.mxu0 0.0
    %769 = vmatprep.subr.mxu0 0.0
    %770 = vmatpush1.msra.mxu0 0.0
    %771 = vmatprep.subr.mxu0 0.0
    %772 = vmatpush1.msra.mxu0 0.0
    %773 = vmatprep.subr.mxu0 0.0
    %774 = vmatpush1.msra.mxu0 0.0
    %775 = vmatprep.subr.mxu0 0.0
    %776 = vmatpush1.msra.mxu0 0.0
    %777 = vmatprep.subr.mxu0 0.0
    %778 = vmatpush1.msra.mxu0 0.0
    %779 = vmatprep.subr.mxu0 0.0
    %780 = vmatpush1.msra.mxu0 0.0
    %781 = vmatprep.subr.mxu0 0.0
    %782 = vmatpush1.msra.mxu0 0.0
    %783 = vmatprep.subr.mxu0 0.0
    %784 = vmatpush1.msra.mxu0 0.0
    %785 = vmatprep.subr.mxu0 0.0
    %786 = vmatpush1.msra.mxu0 0.0
    %787 = vmatprep.subr.mxu0 0.0
    %788 = vmatpush1.msra.mxu0 0.0
    %789 = vmatprep.subr.mxu0 0.0
    %790 = vmatpush1.msra.mxu0 0.0
    %791 = vmatprep.subr.mxu0 0.0
    %792 = vmatpush1.msra.mxu0 0.0
    %793 = vmatprep.subr.mxu0 0.0
    %794 = vmatpush1.msra.mxu0 0.0
    %795 = vmatprep.subr.mxu0 0.0
    %796 = vmatpush1.msra.mxu0 0.0
    %797 = vmatprep.subr.mxu0 0.0
    %798 = vmatpush1.msra.mxu0 0.0
    %799 = vmatprep.subr.mxu0 0.0
    %800 = vmatpush1.msra.mxu0 0.0
    %801 = vmatprep.subr.mxu0 0.0
    %802 = vmatpush1.msra.mxu0 0.0
    %803 = vmatprep.subr.mxu0 0.0
    %804 = vmatpush1.msra.mxu0 0.0
    %805 = vmatprep.subr.mxu0 0.0
    %806 = vmatpush1.msra.mxu0 0.0
    %807 = vmatprep.subr.mxu0 0.0
    %808 = vmatpush1.msra.mxu0 0.0
    %809 = vmatprep.subr.mxu0 0.0
    %810 = vmatpush1.msra.mxu0 0.0
    %811 = vmatprep.mubr.f32.mxu0 0.0
    %812 = vmatmul.mubr.f32.gmra.mrb[0].mxu0 %v745
    %v813 = vpop.f32.mrb[0].mxu0
    %v814 = vadd.f32 0.0, %v813
    %v815 = vpop.f32.mrb[0].mxu0
    %816 = vdwg.mxu0
    %v817 = vadd.f32 %v535, %v814
    %v818 = vxor.u32 %v742, 2147483648
    %v819 = vmul.f32 %v818, 1.442695
    %v820 = vpow.pop %v819
    %v821 = vadd.f32 %v820, 1.0
    %v822 = vrcp.pop %v821
    %v823 = vmul.f32 1.0, %v822
    %v824 = vmul.f32 %v823, 2.0
    %v825 = vsub.f32 %v824, 1.0
    %v826 = vmul.f32 %v823, 0.0
    %828 = vrot.lane.b32.xlu0 %v825, 64
    %v829 = vpop.permute.xlu0 %828
    %v831 = vmul.f32 %v823, %v829
    %833 = vrot.lane.b32.xlu0 %v831, 32
    %v834 = vpop.permute.xlu0 %833
    %v836 = vadd.f32 %v826, %v834
    %v837 = vtanh.pop %v836
    %839 = vrot.lane.b32.xlu0 %v837, 64
    %v840 = vpop.permute.xlu0 %839
    %v842 = vmul.f32 %v823, %v840
    %v843 = vld [vmem:[#allocation12] sm:$0xff]
    %v844 = vld [vmem:[#allocation12 + $0x8] sm:$0xff]
    %v845 = vld [vmem:[#allocation12 + $0x10] sm:$0xff]
    %v846 = vld [vmem:[#allocation12 + $0x18] sm:$0xff]
    %v847 = vld [vmem:[%s13] sm:$0x1]
    %v849 = vlaneseq
    %v850 = vshrl.u32 %v849, 7
    %v851 = vsub.s32 0, %v850
    %v852 = vrot.slane %v847, %v851
    %855 = vrot.lane.b32.xlu0 %v842, 32
    %v856 = vpop.permute.xlu0 %855
    %v857 = vsel %vm157, %v856, 0
    %859 = vmatprep.subr.mxu0 0.0
    %860 = vmatpush1.msra.mxu0 %v843
    %861 = vmatprep.subr.mxu0 0.0
    %862 = vmatpush1.msra.mxu0 %v844
    %863 = vmatprep.subr.mxu0 0.0
    %864 = vmatpush1.msra.mxu0 %v845
    %865 = vmatprep.subr.mxu0 0.0
    %866 = vmatpush1.msra.mxu0 %v846
    %867 = vmatprep.subr.mxu0 0.0
    %868 = vmatpush1.msra.mxu0 0.0
    %869 = vmatprep.subr.mxu0 0.0
    %870 = vmatpush1.msra.mxu0 0.0
    %871 = vmatprep.subr.mxu0 0.0
    %872 = vmatpush1.msra.mxu0 0.0
    %873 = vmatprep.subr.mxu0 0.0
    %874 = vmatpush1.msra.mxu0 0.0
    %875 = vmatprep.subr.mxu0 0.0
    %876 = vmatpush1.msra.mxu0 0.0
    %877 = vmatprep.subr.mxu0 0.0
    %878 = vmatpush1.msra.mxu0 0.0
    %879 = vmatprep.subr.mxu0 0.0
    %880 = vmatpush1.msra.mxu0 0.0
    %881 = vmatprep.subr.mxu0 0.0
    %882 = vmatpush1.msra.mxu0 0.0
    %883 = vmatprep.subr.mxu0 0.0
    %884 = vmatpush1.msra.mxu0 0.0
    %885 = vmatprep.subr.mxu0 0.0
    %886 = vmatpush1.msra.mxu0 0.0
    %887 = vmatprep.subr.mxu0 0.0
    %888 = vmatpush1.msra.mxu0 0.0
    %889 = vmatprep.subr.mxu0 0.0
    %890 = vmatpush1.msra.mxu0 0.0
    %891 = vmatprep.subr.mxu0 0.0
    %892 = vmatpush1.msra.mxu0 0.0
    %893 = vmatprep.subr.mxu0 0.0
    %894 = vmatpush1.msra.mxu0 0.0
    %895 = vmatprep.subr.mxu0 0.0
    %896 = vmatpush1.msra.mxu0 0.0
    %897 = vmatprep.subr.mxu0 0.0
    %898 = vmatpush1.msra.mxu0 0.0
    %899 = vmatprep.subr.mxu0 0.0
    %900 = vmatpush1.msra.mxu0 0.0
    %901 = vmatprep.subr.mxu0 0.0
    %902 = vmatpush1.msra.mxu0 0.0
    %903 = vmatprep.subr.mxu0 0.0
    %904 = vmatpush1.msra.mxu0 0.0
    %905 = vmatprep.subr.mxu0 0.0
    %906 = vmatpush1.msra.mxu0 0.0
    %907 = vmatprep.subr.mxu0 0.0
    %908 = vmatpush1.msra.mxu0 0.0
    %909 = vmatprep.subr.mxu0 0.0
    %910 = vmatpush1.msra.mxu0 0.0
    %911 = vmatprep.subr.mxu0 0.0
    %912 = vmatpush1.msra.mxu0 0.0
    %913 = vmatprep.subr.mxu0 0.0
    %914 = vmatpush1.msra.mxu0 0.0
    %915 = vmatprep.subr.mxu0 0.0
    %916 = vmatpush1.msra.mxu0 0.0
    %917 = vmatprep.subr.mxu0 0.0
    %918 = vmatpush1.msra.mxu0 0.0
    %919 = vmatprep.subr.mxu0 0.0
    %920 = vmatpush1.msra.mxu0 0.0
    %921 = vmatprep.subr.mxu0 0.0
    %922 = vmatpush1.msra.mxu0 0.0
    %923 = vmatprep.mubr.f32.mxu0 0.0
    %924 = vmatmul.mubr.f32.gmra.mrb[0].mxu0 %v857
    %v925 = vpop.f32.mrb[0].mxu0
    %v926 = vadd.f32 %v852, %v925
    %v927 = vpop.f32.mrb[0].mxu0
    %928 = vdwg.mxu0
    %929 = vst [vmem:[%s14] sm:$0xff] %v926
    %v930 = vxor.u32 %v817, 2147483648
    %v931 = vmul.f32 %v930, 1.442695
    %v932 = vpow.pop %v931
    %v933 = vadd.f32 %v932, 1.0
    %v934 = vrcp.pop %v933
    %v935 = vmul.f32 1.0, %v934
    %v936 = vmul.f32 %v935, 2.0
    %v937 = vsub.f32 %v936, 1.0
    %v938 = vmul.f32 %v935, %v644
    %940 = vrot.lane.b32.xlu0 %v937, 64
    %v941 = vpop.permute.xlu0 %940
    %v943 = vmul.f32 %v935, %v941
    %945 = vrot.lane.b32.xlu0 %v943, 32
    %v946 = vpop.permute.xlu0 %945
    %v948 = vadd.f32 %v938, %v946
    %v949 = vtanh.pop %v948
    %951 = vrot.lane.b32.xlu0 %v949, 64
    %v952 = vpop.permute.xlu0 %951
    %v954 = vmul.f32 %v935, %v952
    %956 = vrot.lane.b32.xlu0 %v954, 32
    %v957 = vpop.permute.xlu0 %956
    %959 = vrot.lane.b32.xlu0 %v842, 64
    %v960 = vpop.permute.xlu0 %959
    %v962 = vsel %vm157, %v957, %v960
    %v963 = vld [vmem:[#allocation10] sm:$0xff]
    %v964 = vld [vmem:[#allocation10 + $0x8] sm:$0xff]
    %v965 = vld [vmem:[#allocation10 + $0x10] sm:$0xff]
    %v966 = vld [vmem:[#allocation10 + $0x18] sm:$0xff]
    %v967 = vld [vmem:[#allocation10 + $0x20] sm:$0xff]
    %v968 = vld [vmem:[#allocation10 + $0x28] sm:$0xff]
    %v969 = vld [vmem:[#allocation10 + $0x30] sm:$0xff]
    %v970 = vld [vmem:[#allocation10 + $0x38] sm:$0xff]
    %v971 = vld [vmem:[%s11] sm:$0x1]
    %v973 = vlaneseq
    %v974 = vshrl.u32 %v973, 7
    %v975 = vsub.s32 0, %v974
    %v976 = vrot.slane %v971, %v975
    %v979 = vsel %vm671, %v962, 0
    %981 = vmatprep.subr.mxu0 0.0
    %982 = vmatpush1.msra.mxu0 %v963
    %983 = vmatprep.subr.mxu0 0.0
    %984 = vmatpush1.msra.mxu0 %v964
    %985 = vmatprep.subr.mxu0 0.0
    %986 = vmatpush1.msra.mxu0 %v965
    %987 = vmatprep.subr.mxu0 0.0
    %988 = vmatpush1.msra.mxu0 %v966
    %989 = vmatprep.subr.mxu0 0.0
    %990 = vmatpush1.msra.mxu0 %v967
    %991 = vmatprep.subr.mxu0 0.0
    %992 = vmatpush1.msra.mxu0 %v968
    %993 = vmatprep.subr.mxu0 0.0
    %994 = vmatpush1.msra.mxu0 %v969
    %995 = vmatprep.subr.mxu0 0.0
    %996 = vmatpush1.msra.mxu0 %v970
    %997 = vmatprep.subr.mxu0 0.0
    %998 = vmatpush1.msra.mxu0 0.0
    %999 = vmatprep.subr.mxu0 0.0
    %1000 = vmatpush1.msra.mxu0 0.0
    %1001 = vmatprep.subr.mxu0 0.0
    %1002 = vmatpush1.msra.mxu0 0.0
    %1003 = vmatprep.subr.mxu0 0.0
    %1004 = vmatpush1.msra.mxu0 0.0
    %1005 = vmatprep.subr.mxu0 0.0
    %1006 = vmatpush1.msra.mxu0 0.0
    %1007 = vmatprep.subr.mxu0 0.0
    %1008 = vmatpush1.msra.mxu0 0.0
    %1009 = vmatprep.subr.mxu0 0.0
    %1010 = vmatpush1.msra.mxu0 0.0
    %1011 = vmatprep.subr.mxu0 0.0
    %1012 = vmatpush1.msra.mxu0 0.0
    %1013 = vmatprep.subr.mxu0 0.0
    %1014 = vmatpush1.msra.mxu0 0.0
    %1015 = vmatprep.subr.mxu0 0.0
    %1016 = vmatpush1.msra.mxu0 0.0
    %1017 = vmatprep.subr.mxu0 0.0
    %1018 = vmatpush1.msra.mxu0 0.0
    %1019 = vmatprep.subr.mxu0 0.0
    %1020 = vmatpush1.msra.mxu0 0.0
    %1021 = vmatprep.subr.mxu0 0.0
    %1022 = vmatpush1.msra.mxu0 0.0
    %1023 = vmatprep.subr.mxu0 0.0
    %1024 = vmatpush1.msra.mxu0 0.0
    %1025 = vmatprep.subr.mxu0 0.0
    %1026 = vmatpush1.msra.mxu0 0.0
    %1027 = vmatprep.subr.mxu0 0.0
    %1028 = vmatpush1.msra.mxu0 0.0
    %1029 = vmatprep.subr.mxu0 0.0
    %1030 = vmatpush1.msra.mxu0 0.0
    %1031 = vmatprep.subr.mxu0 0.0
    %1032 = vmatpush1.msra.mxu0 0.0
    %1033 = vmatprep.subr.mxu0 0.0
    %1034 = vmatpush1.msra.mxu0 0.0
    %1035 = vmatprep.subr.mxu0 0.0
    %1036 = vmatpush1.msra.mxu0 0.0
    %1037 = vmatprep.subr.mxu0 0.0
    %1038 = vmatpush1.msra.mxu0 0.0
    %1039 = vmatprep.subr.mxu0 0.0
    %1040 = vmatpush1.msra.mxu0 0.0
    %1041 = vmatprep.subr.mxu0 0.0
    %1042 = vmatpush1.msra.mxu0 0.0
    %1043 = vmatprep.subr.mxu0 0.0
    %1044 = vmatpush1.msra.mxu0 0.0
    %1045 = vmatprep.mubr.f32.mxu0 0.0
    %1046 = vmatmul.mubr.f32.gmra.mrb[0].mxu0 %v979
    %v1047 = vpop.f32.mrb[0].mxu0
    %v1048 = vadd.f32 %v976, %v1047
    %v1049 = vpop.f32.mrb[0].mxu0
    %1050 = vdwg.mxu0
    %v1051 = vld [vmem:[#allocation9] sm:$0xff]
    %v1052 = vld [vmem:[#allocation9 + $0x8] sm:$0xff]
    %v1053 = vld [vmem:[#allocation9 + $0x10] sm:$0xff]
    %v1054 = vld [vmem:[#allocation9 + $0x18] sm:$0xff]
    %v1055 = vsel %vm157, %v957, 0
    %1057 = vmatprep.subr.mxu0 0.0
    %1058 = vmatpush1.msra.mxu0 %v1051
    %1059 = vmatprep.subr.mxu0 0.0
    %1060 = vmatpush1.msra.mxu0 %v1052
    %1061 = vmatprep.subr.mxu0 0.0
    %1062 = vmatpush1.msra.mxu0 %v1053
    %1063 = vmatprep.subr.mxu0 0.0
    %1064 = vmatpush1.msra.mxu0 %v1054
    %1065 = vmatprep.subr.mxu0 0.0
    %1066 = vmatpush1.msra.mxu0 0.0
    %1067 = vmatprep.subr.mxu0 0.0
    %1068 = vmatpush1.msra.mxu0 0.0
    %1069 = vmatprep.subr.mxu0 0.0
    %1070 = vmatpush1.msra.mxu0 0.0
    %1071 = vmatprep.subr.mxu0 0.0
    %1072 = vmatpush1.msra.mxu0 0.0
    %1073 = vmatprep.subr.mxu0 0.0
    %1074 = vmatpush1.msra.mxu0 0.0
    %1075 = vmatprep.subr.mxu0 0.0
    %1076 = vmatpush1.msra.mxu0 0.0
    %1077 = vmatprep.subr.mxu0 0.0
    %1078 = vmatpush1.msra.mxu0 0.0
    %1079 = vmatprep.subr.mxu0 0.0
    %1080 = vmatpush1.msra.mxu0 0.0
    %1081 = vmatprep.subr.mxu0 0.0
    %1082 = vmatpush1.msra.mxu0 0.0
    %1083 = vmatprep.subr.mxu0 0.0
    %1084 = vmatpush1.msra.mxu0 0.0
    %1085 = vmatprep.subr.mxu0 0.0
    %1086 = vmatpush1.msra.mxu0 0.0
    %1087 = vmatprep.subr.mxu0 0.0
    %1088 = vmatpush1.msra.mxu0 0.0
    %1089 = vmatprep.subr.mxu0 0.0
    %1090 = vmatpush1.msra.mxu0 0.0
    %1091 = vmatprep.subr.mxu0 0.0
    %1092 = vmatpush1.msra.mxu0 0.0
    %1093 = vmatprep.subr.mxu0 0.0
    %1094 = vmatpush1.msra.mxu0 0.0
    %1095 = vmatprep.subr.mxu0 0.0
    %1096 = vmatpush1.msra.mxu0 0.0
    %1097 = vmatprep.subr.mxu0 0.0
    %1098 = vmatpush1.msra.mxu0 0.0
    %1099 = vmatprep.subr.mxu0 0.0
    %1100 = vmatpush1.msra.mxu0 0.0
    %1101 = vmatprep.subr.mxu0 0.0
    %1102 = vmatpush1.msra.mxu0 0.0
    %1103 = vmatprep.subr.mxu0 0.0
    %1104 = vmatpush1.msra.mxu0 0.0
    %1105 = vmatprep.subr.mxu0 0.0
    %1106 = vmatpush1.msra.mxu0 0.0
    %1107 = vmatprep.subr.mxu0 0.0
    %1108 = vmatpush1.msra.mxu0 0.0
    %1109 = vmatprep.subr.mxu0 0.0
    %1110 = vmatpush1.msra.mxu0 0.0
    %1111 = vmatprep.subr.mxu0 0.0
    %1112 = vmatpush1.msra.mxu0 0.0
    %1113 = vmatprep.subr.mxu0 0.0
    %1114 = vmatpush1.msra.mxu0 0.0
    %1115 = vmatprep.subr.mxu0 0.0
    %1116 = vmatpush1.msra.mxu0 0.0
    %1117 = vmatprep.subr.mxu0 0.0
    %1118 = vmatpush1.msra.mxu0 0.0
    %1119 = vmatprep.subr.mxu0 0.0
    %1120 = vmatpush1.msra.mxu0 0.0
    %1121 = vmatprep.mubr.f32.mxu0 0.0
    %1122 = vmatmul.mubr.f32.gmra.mrb[0].mxu0 %v1055
    %v1123 = vpop.f32.mrb[0].mxu0
    %v1124 = vadd.f32 0.0, %v1123
    %v1125 = vpop.f32.mrb[0].mxu0
    %1126 = vdwg.mxu0
    %v1127 = vadd.f32 %v540, %v1124
    %v1128 = vxor.u32 %v1048, 2147483648
    %v1129 = vmul.f32 %v1128, 1.442695
    %v1130 = vpow.pop %v1129
    %v1131 = vadd.f32 %v1130, 1.0
    %v1132 = vrcp.pop %v1131
    %v1133 = vmul.f32 1.0, %v1132
    %v1134 = vmul.f32 %v1133, 2.0
    %v1135 = vsub.f32 %v1134, 1.0
    %v1136 = vmul.f32 %v1133, %v836
    %1138 = vrot.lane.b32.xlu0 %v1135, 64
    %v1139 = vpop.permute.xlu0 %1138
    %v1141 = vmul.f32 %v1133, %v1139
    %1143 = vrot.lane.b32.xlu0 %v1141, 32
    %v1144 = vpop.permute.xlu0 %1143
    %v1146 = vadd.f32 %v1136, %v1144
    %v1147 = vtanh.pop %v1146
    %1149 = vrot.lane.b32.xlu0 %v1147, 64
    %v1150 = vpop.permute.xlu0 %1149
    %v1152 = vmul.f32 %v1133, %v1150
    %v1153 = vld [vmem:[#allocation12] sm:$0xff]
    %v1154 = vld [vmem:[#allocation12 + $0x8] sm:$0xff]
    %v1155 = vld [vmem:[#allocation12 + $0x10] sm:$0xff]
    %v1156 = vld [vmem:[#allocation12 + $0x18] sm:$0xff]
    %v1157 = vld [vmem:[%s13] sm:$0x1]
    %v1159 = vlaneseq
    %v1160 = vshrl.u32 %v1159, 7
    %v1161 = vsub.s32 0, %v1160
    %v1162 = vrot.slane %v1157, %v1161
    %1165 = vrot.lane.b32.xlu0 %v1152, 32
    %v1166 = vpop.permute.xlu0 %1165
    %v1167 = vsel %vm157, %v1166, 0
    %1169 = vmatprep.subr.mxu0 0.0
    %1170 = vmatpush1.msra.mxu0 %v1153
    %1171 = vmatprep.subr.mxu0 0.0
    %1172 = vmatpush1.msra.mxu0 %v1154
    %1173 = vmatprep.subr.mxu0 0.0
    %1174 = vmatpush1.msra.mxu0 %v1155
    %1175 = vmatprep.subr.mxu0 0.0
    %1176 = vmatpush1.msra.mxu0 %v1156
    %1177 = vmatprep.subr.mxu0 0.0
    %1178 = vmatpush1.msra.mxu0 0.0
    %1179 = vmatprep.subr.mxu0 0.0
    %1180 = vmatpush1.msra.mxu0 0.0
    %1181 = vmatprep.subr.mxu0 0.0
    %1182 = vmatpush1.msra.mxu0 0.0
    %1183 = vmatprep.subr.mxu0 0.0
    %1184 = vmatpush1.msra.mxu0 0.0
    %1185 = vmatprep.subr.mxu0 0.0
    %1186 = vmatpush1.msra.mxu0 0.0
    %1187 = vmatprep.subr.mxu0 0.0
    %1188 = vmatpush1.msra.mxu0 0.0
    %1189 = vmatprep.subr.mxu0 0.0
    %1190 = vmatpush1.msra.mxu0 0.0
    %1191 = vmatprep.subr.mxu0 0.0
    %1192 = vmatpush1.msra.mxu0 0.0
    %1193 = vmatprep.subr.mxu0 0.0
    %1194 = vmatpush1.msra.mxu0 0.0
    %1195 = vmatprep.subr.mxu0 0.0
    %1196 = vmatpush1.msra.mxu0 0.0
    %1197 = vmatprep.subr.mxu0 0.0
    %1198 = vmatpush1.msra.mxu0 0.0
    %1199 = vmatprep.subr.mxu0 0.0
    %1200 = vmatpush1.msra.mxu0 0.0
    %1201 = vmatprep.subr.mxu0 0.0
    %1202 = vmatpush1.msra.mxu0 0.0
    %1203 = vmatprep.subr.mxu0 0.0
    %1204 = vmatpush1.msra.mxu0 0.0
    %1205 = vmatprep.subr.mxu0 0.0
    %1206 = vmatpush1.msra.mxu0 0.0
    %1207 = vmatprep.subr.mxu0 0.0
    %1208 = vmatpush1.msra.mxu0 0.0
    %1209 = vmatprep.subr.mxu0 0.0
    %1210 = vmatpush1.msra.mxu0 0.0
    %1211 = vmatprep.subr.mxu0 0.0
    %1212 = vmatpush1.msra.mxu0 0.0
    %1213 = vmatprep.subr.mxu0 0.0
    %1214 = vmatpush1.msra.mxu0 0.0
    %1215 = vmatprep.subr.mxu0 0.0
    %1216 = vmatpush1.msra.mxu0 0.0
    %1217 = vmatprep.subr.mxu0 0.0
    %1218 = vmatpush1.msra.mxu0 0.0
    %1219 = vmatprep.subr.mxu0 0.0
    %1220 = vmatpush1.msra.mxu0 0.0
    %1221 = vmatprep.subr.mxu0 0.0
    %1222 = vmatpush1.msra.mxu0 0.0
    %1223 = vmatprep.subr.mxu0 0.0
    %1224 = vmatpush1.msra.mxu0 0.0
    %1225 = vmatprep.subr.mxu0 0.0
    %1226 = vmatpush1.msra.mxu0 0.0
    %1227 = vmatprep.subr.mxu0 0.0
    %1228 = vmatpush1.msra.mxu0 0.0
    %1229 = vmatprep.subr.mxu0 0.0
    %1230 = vmatpush1.msra.mxu0 0.0
    %1231 = vmatprep.subr.mxu0 0.0
    %1232 = vmatpush1.msra.mxu0 0.0
    %1233 = vmatprep.mubr.f32.mxu0 0.0
    %1234 = vmatmul.mubr.f32.gmra.mrb[0].mxu0 %v1167
    %v1235 = vpop.f32.mrb[0].mxu0
    %v1236 = vadd.f32 %v1162, %v1235
    %v1237 = vpop.f32.mrb[0].mxu0
    %1238 = vdwg.mxu0
    %1239 = vst [vmem:[%s14 + $0x8] sm:$0xff] %v1236
    %v1240 = vxor.u32 %v1127, 2147483648
    %v1241 = vmul.f32 %v1240, 1.442695
    %v1242 = vpow.pop %v1241
    %v1243 = vadd.f32 %v1242, 1.0
    %v1244 = vrcp.pop %v1243
    %v1245 = vmul.f32 1.0, %v1244
    %v1246 = vmul.f32 %v1245, 2.0
    %v1247 = vsub.f32 %v1246, 1.0
    %v1248 = vmul.f32 %v1245, %v948
    %1250 = vrot.lane.b32.xlu0 %v1247, 64
    %v1251 = vpop.permute.xlu0 %1250
    %v1253 = vmul.f32 %v1245, %v1251
    %1255 = vrot.lane.b32.xlu0 %v1253, 32
    %v1256 = vpop.permute.xlu0 %1255
    %v1258 = vadd.f32 %v1248, %v1256
    %v1259 = vtanh.pop %v1258
    %1261 = vrot.lane.b32.xlu0 %v1259, 64
    %v1262 = vpop.permute.xlu0 %1261
    %v1264 = vmul.f32 %v1245, %v1262
    %1266 = vrot.lane.b32.xlu0 %v1264, 32
    %v1267 = vpop.permute.xlu0 %1266
    %1269 = vrot.lane.b32.xlu0 %v1152, 64
    %v1270 = vpop.permute.xlu0 %1269
    %v1272 = vsel %vm157, %v1267, %v1270
    %v1273 = vld [vmem:[#allocation10] sm:$0xff]
    %v1274 = vld [vmem:[#allocation10 + $0x8] sm:$0xff]
    %v1275 = vld [vmem:[#allocation10 + $0x10] sm:$0xff]
    %v1276 = vld [vmem:[#allocation10 + $0x18] sm:$0xff]
    %v1277 = vld [vmem:[#allocation10 + $0x20] sm:$0xff]
    %v1278 = vld [vmem:[#allocation10 + $0x28] sm:$0xff]
    %v1279 = vld [vmem:[#allocation10 + $0x30] sm:$0xff]
    %v1280 = vld [vmem:[#allocation10 + $0x38] sm:$0xff]
    %v1281 = vld [vmem:[%s11] sm:$0x1]
    %v1283 = vlaneseq
    %v1284 = vshrl.u32 %v1283, 7
    %v1285 = vsub.s32 0, %v1284
    %v1286 = vrot.slane %v1281, %v1285
    %v1289 = vsel %vm671, %v1272, 0
    %1291 = vmatprep.subr.mxu0 0.0
    %1292 = vmatpush1.msra.mxu0 %v1273
    %1293 = vmatprep.subr.mxu0 0.0
    %1294 = vmatpush1.msra.mxu0 %v1274
    %1295 = vmatprep.subr.mxu0 0.0
    %1296 = vmatpush1.msra.mxu0 %v1275
    %1297 = vmatprep.subr.mxu0 0.0
    %1298 = vmatpush1.msra.mxu0 %v1276
    %1299 = vmatprep.subr.mxu0 0.0
    %1300 = vmatpush1.msra.mxu0 %v1277
    %1301 = vmatprep.subr.mxu0 0.0
    %1302 = vmatpush1.msra.mxu0 %v1278
    %1303 = vmatprep.subr.mxu0 0.0
    %1304 = vmatpush1.msra.mxu0 %v1279
    %1305 = vmatprep.subr.mxu0 0.0
    %1306 = vmatpush1.msra.mxu0 %v1280
    %1307 = vmatprep.subr.mxu0 0.0
    %1308 = vmatpush1.msra.mxu0 0.0
    %1309 = vmatprep.subr.mxu0 0.0
    %1310 = vmatpush1.msra.mxu0 0.0
    %1311 = vmatprep.subr.mxu0 0.0
    %1312 = vmatpush1.msra.mxu0 0.0
    %1313 = vmatprep.subr.mxu0 0.0
    %1314 = vmatpush1.msra.mxu0 0.0
    %1315 = vmatprep.subr.mxu0 0.0
    %1316 = vmatpush1.msra.mxu0 0.0
    %1317 = vmatprep.subr.mxu0 0.0
    %1318 = vmatpush1.msra.mxu0 0.0
    %1319 = vmatprep.subr.mxu0 0.0
    %1320 = vmatpush1.msra.mxu0 0.0
    %1321 = vmatprep.subr.mxu0 0.0
    %1322 = vmatpush1.msra.mxu0 0.0
    %1323 = vmatprep.subr.mxu0 0.0
    %1324 = vmatpush1.msra.mxu0 0.0
    %1325 = vmatprep.subr.mxu0 0.0
    %1326 = vmatpush1.msra.mxu0 0.0
    %1327 = vmatprep.subr.mxu0 0.0
    %1328 = vmatpush1.msra.mxu0 0.0
    %1329 = vmatprep.subr.mxu0 0.0
    %1330 = vmatpush1.msra.mxu0 0.0
    %1331 = vmatprep.subr.mxu0 0.0
    %1332 = vmatpush1.msra.mxu0 0.0
    %1333 = vmatprep.subr.mxu0 0.0
    %1334 = vmatpush1.msra.mxu0 0.0
    %1335 = vmatprep.subr.mxu0 0.0
    %1336 = vmatpush1.msra.mxu0 0.0
    %1337 = vmatprep.subr.mxu0 0.0
    %1338 = vmatpush1.msra.mxu0 0.0
    %1339 = vmatprep.subr.mxu0 0.0
    %1340 = vmatpush1.msra.mxu0 0.0
    %1341 = vmatprep.subr.mxu0 0.0
    %1342 = vmatpush1.msra.mxu0 0.0
    %1343 = vmatprep.subr.mxu0 0.0
    %1344 = vmatpush1.msra.mxu0 0.0
    %1345 = vmatprep.subr.mxu0 0.0
    %1346 = vmatpush1.msra.mxu0 0.0
    %1347 = vmatprep.subr.mxu0 0.0
    %1348 = vmatpush1.msra.mxu0 0.0
    %1349 = vmatprep.subr.mxu0 0.0
    %1350 = vmatpush1.msra.mxu0 0.0
    %1351 = vmatprep.subr.mxu0 0.0
    %1352 = vmatpush1.msra.mxu0 0.0
    %1353 = vmatprep.subr.mxu0 0.0
    %1354 = vmatpush1.msra.mxu0 0.0
    %1355 = vmatprep.mubr.f32.mxu0 0.0
    %1356 = vmatmul.mubr.f32.gmra.mrb[0].mxu0 %v1289
    %v1357 = vpop.f32.mrb[0].mxu0
    %v1358 = vadd.f32 %v1286, %v1357
    %v1359 = vpop.f32.mrb[0].mxu0
    %1360 = vdwg.mxu0
    %v1361 = vld [vmem:[#allocation9] sm:$0xff]
    %v1362 = vld [vmem:[#allocation9 + $0x8] sm:$0xff]
    %v1363 = vld [vmem:[#allocation9 + $0x10] sm:$0xff]
    %v1364 = vld [vmem:[#allocation9 + $0x18] sm:$0xff]
    %v1365 = vsel %vm157, %v1267, 0
    %1367 = vmatprep.subr.mxu0 0.0
    %1368 = vmatpush1.msra.mxu0 %v1361
    %1369 = vmatprep.subr.mxu0 0.0
    %1370 = vmatpush1.msra.mxu0 %v1362
    %1371 = vmatprep.subr.mxu0 0.0
    %1372 = vmatpush1.msra.mxu0 %v1363
    %1373 = vmatprep.subr.mxu0 0.0
    %1374 = vmatpush1.msra.mxu0 %v1364
    %1375 = vmatprep.subr.mxu0 0.0
    %1376 = vmatpush1.msra.mxu0 0.0
    %1377 = vmatprep.subr.mxu0 0.0
    %1378 = vmatpush1.msra.mxu0 0.0
    %1379 = vmatprep.subr.mxu0 0.0
    %1380 = vmatpush1.msra.mxu0 0.0
    %1381 = vmatprep.subr.mxu0 0.0
    %1382 = vmatpush1.msra.mxu0 0.0
    %1383 = vmatprep.subr.mxu0 0.0
    %1384 = vmatpush1.msra.mxu0 0.0
    %1385 = vmatprep.subr.mxu0 0.0
    %1386 = vmatpush1.msra.mxu0 0.0
    %1387 = vmatprep.subr.mxu0 0.0
    %1388 = vmatpush1.msra.mxu0 0.0
    %1389 = vmatprep.subr.mxu0 0.0
    %1390 = vmatpush1.msra.mxu0 0.0
    %1391 = vmatprep.subr.mxu0 0.0
    %1392 = vmatpush1.msra.mxu0 0.0
    %1393 = vmatprep.subr.mxu0 0.0
    %1394 = vmatpush1.msra.mxu0 0.0
    %1395 = vmatprep.subr.mxu0 0.0
    %1396 = vmatpush1.msra.mxu0 0.0
    %1397 = vmatprep.subr.mxu0 0.0
    %1398 = vmatpush1.msra.mxu0 0.0
    %1399 = vmatprep.subr.mxu0 0.0
    %1400 = vmatpush1.msra.mxu0 0.0
    %1401 = vmatprep.subr.mxu0 0.0
    %1402 = vmatpush1.msra.mxu0 0.0
    %1403 = vmatprep.subr.mxu0 0.0
    %1404 = vmatpush1.msra.mxu0 0.0
    %1405 = vmatprep.subr.mxu0 0.0
    %1406 = vmatpush1.msra.mxu0 0.0
    %1407 = vmatprep.subr.mxu0 0.0
    %1408 = vmatpush1.msra.mxu0 0.0
    %1409 = vmatprep.subr.mxu0 0.0
    %1410 = vmatpush1.msra.mxu0 0.0
    %1411 = vmatprep.subr.mxu0 0.0
    %1412 = vmatpush1.msra.mxu0 0.0
    %1413 = vmatprep.subr.mxu0 0.0
    %1414 = vmatpush1.msra.mxu0 0.0
    %1415 = vmatprep.subr.mxu0 0.0
    %1416 = vmatpush1.msra.mxu0 0.0
    %1417 = vmatprep.subr.mxu0 0.0
    %1418 = vmatpush1.msra.mxu0 0.0
    %1419 = vmatprep.subr.mxu0 0.0
    %1420 = vmatpush1.msra.mxu0 0.0
    %1421 = vmatprep.subr.mxu0 0.0
    %1422 = vmatpush1.msra.mxu0 0.0
    %1423 = vmatprep.subr.mxu0 0.0
    %1424 = vmatpush1.msra.mxu0 0.0
    %1425 = vmatprep.subr.mxu0 0.0
    %1426 = vmatpush1.msra.mxu0 0.0
    %1427 = vmatprep.subr.mxu0 0.0
    %1428 = vmatpush1.msra.mxu0 0.0
    %1429 = vmatprep.subr.mxu0 0.0
    %1430 = vmatpush1.msra.mxu0 0.0
    %1431 = vmatprep.mubr.f32.mxu0 0.0
    %1432 = vmatmul.mubr.f32.gmra.mrb[0].mxu0 %v1365
    %v1433 = vpop.f32.mrb[0].mxu0
    %v1434 = vadd.f32 0.0, %v1433
    %v1435 = vpop.f32.mrb[0].mxu0
    %1436 = vdwg.mxu0
    %v1437 = vadd.f32 %v545, %v1434
    %v1438 = vxor.u32 %v1358, 2147483648
    %v1439 = vmul.f32 %v1438, 1.442695
    %v1440 = vpow.pop %v1439
    %v1441 = vadd.f32 %v1440, 1.0
    %v1442 = vrcp.pop %v1441
    %v1443 = vmul.f32 1.0, %v1442
    %v1444 = vmul.f32 %v1443, 2.0
    %v1445 = vsub.f32 %v1444, 1.0
    %v1446 = vmul.f32 %v1443, %v1146
    %1448 = vrot.lane.b32.xlu0 %v1445, 64
    %v1449 = vpop.permute.xlu0 %1448
    %v1451 = vmul.f32 %v1443, %v1449
    %1453 = vrot.lane.b32.xlu0 %v1451, 32
    %v1454 = vpop.permute.xlu0 %1453
    %v1456 = vadd.f32 %v1446, %v1454
    %v1457 = vtanh.pop %v1456
    %1459 = vrot.lane.b32.xlu0 %v1457, 64
    %v1460 = vpop.permute.xlu0 %1459
    %v1462 = vmul.f32 %v1443, %v1460
    %v1463 = vld [vmem:[#allocation12] sm:$0xff]
    %v1464 = vld [vmem:[#allocation12 + $0x8] sm:$0xff]
    %v1465 = vld [vmem:[#allocation12 + $0x10] sm:$0xff]
    %v1466 = vld [vmem:[#allocation12 + $0x18] sm:$0xff]
    %v1467 = vld [vmem:[%s13] sm:$0x1]
    %v1469 = vlaneseq
    %v1470 = vshrl.u32 %v1469, 7
    %v1471 = vsub.s32 0, %v1470
    %v1472 = vrot.slane %v1467, %v1471
    %1475 = vrot.lane.b32.xlu0 %v1462, 32
    %v1476 = vpop.permute.xlu0 %1475
    %v1477 = vsel %vm157, %v1476, 0
    %1479 = vmatprep.subr.mxu0 0.0
    %1480 = vmatpush1.msra.mxu0 %v1463
    %1481 = vmatprep.subr.mxu0 0.0
    %1482 = vmatpush1.msra.mxu0 %v1464
    %1483 = vmatprep.subr.mxu0 0.0
    %1484 = vmatpush1.msra.mxu0 %v1465
    %1485 = vmatprep.subr.mxu0 0.0
    %1486 = vmatpush1.msra.mxu0 %v1466
    %1487 = vmatprep.subr.mxu0 0.0
    %1488 = vmatpush1.msra.mxu0 0.0
    %1489 = vmatprep.subr.mxu0 0.0
    %1490 = vmatpush1.msra.mxu0 0.0
    %1491 = vmatprep.subr.mxu0 0.0
    %1492 = vmatpush1.msra.mxu0 0.0
    %1493 = vmatprep.subr.mxu0 0.0
    %1494 = vmatpush1.msra.mxu0 0.0
    %1495 = vmatprep.subr.mxu0 0.0
    %1496 = vmatpush1.msra.mxu0 0.0
    %1497 = vmatprep.subr.mxu0 0.0
    %1498 = vmatpush1.msra.mxu0 0.0
    %1499 = vmatprep.subr.mxu0 0.0
    %1500 = vmatpush1.msra.mxu0 0.0
    %1501 = vmatprep.subr.mxu0 0.0
    %1502 = vmatpush1.msra.mxu0 0.0
    %1503 = vmatprep.subr.mxu0 0.0
    %1504 = vmatpush1.msra.mxu0 0.0
    %1505 = vmatprep.subr.mxu0 0.0
    %1506 = vmatpush1.msra.mxu0 0.0
    %1507 = vmatprep.subr.mxu0 0.0
    %1508 = vmatpush1.msra.mxu0 0.0
    %1509 = vmatprep.subr.mxu0 0.0
    %1510 = vmatpush1.msra.mxu0 0.0
    %1511 = vmatprep.subr.mxu0 0.0
    %1512 = vmatpush1.msra.mxu0 0.0
    %1513 = vmatprep.subr.mxu0 0.0
    %1514 = vmatpush1.msra.mxu0 0.0
    %1515 = vmatprep.subr.mxu0 0.0
    %1516 = vmatpush1.msra.mxu0 0.0
    %1517 = vmatprep.subr.mxu0 0.0
    %1518 = vmatpush1.msra.mxu0 0.0
    %1519 = vmatprep.subr.mxu0 0.0
    %1520 = vmatpush1.msra.mxu0 0.0
    %1521 = vmatprep.subr.mxu0 0.0
    %1522 = vmatpush1.msra.mxu0 0.0
    %1523 = vmatprep.subr.mxu0 0.0
    %1524 = vmatpush1.msra.mxu0 0.0
    %1525 = vmatprep.subr.mxu0 0.0
    %1526 = vmatpush1.msra.mxu0 0.0
    %1527 = vmatprep.subr.mxu0 0.0
    %1528 = vmatpush1.msra.mxu0 0.0
    %1529 = vmatprep.subr.mxu0 0.0
    %1530 = vmatpush1.msra.mxu0 0.0
    %1531 = vmatprep.subr.mxu0 0.0
    %1532 = vmatpush1.msra.mxu0 0.0
    %1533 = vmatprep.subr.mxu0 0.0
    %1534 = vmatpush1.msra.mxu0 0.0
    %1535 = vmatprep.subr.mxu0 0.0
    %1536 = vmatpush1.msra.mxu0 0.0
    %1537 = vmatprep.subr.mxu0 0.0
    %1538 = vmatpush1.msra.mxu0 0.0
    %1539 = vmatprep.subr.mxu0 0.0
    %1540 = vmatpush1.msra.mxu0 0.0
    %1541 = vmatprep.subr.mxu0 0.0
    %1542 = vmatpush1.msra.mxu0 0.0
    %1543 = vmatprep.mubr.f32.mxu0 0.0
    %1544 = vmatmul.mubr.f32.gmra.mrb[0].mxu0 %v1477
    %v1545 = vpop.f32.mrb[0].mxu0
    %v1546 = vadd.f32 %v1472, %v1545
    %v1547 = vpop.f32.mrb[0].mxu0
    %1548 = vdwg.mxu0
    %1549 = vst [vmem:[%s14 + $0x10] sm:$0xff] %v1546
    %v1550 = vxor.u32 %v1437, 2147483648
    %v1551 = vmul.f32 %v1550, 1.442695
    %v1552 = vpow.pop %v1551
    %v1553 = vadd.f32 %v1552, 1.0
    %v1554 = vrcp.pop %v1553
    %v1555 = vmul.f32 1.0, %v1554
    %v1556 = vmul.f32 %v1555, 2.0
    %v1557 = vsub.f32 %v1556, 1.0
    %v1558 = vmul.f32 %v1555, %v1258
    %1560 = vrot.lane.b32.xlu0 %v1557, 64
    %v1561 = vpop.permute.xlu0 %1560
    %v1563 = vmul.f32 %v1555, %v1561
    %1565 = vrot.lane.b32.xlu0 %v1563, 32
    %v1566 = vpop.permute.xlu0 %1565
    %v1568 = vadd.f32 %v1558, %v1566
    %v1569 = vtanh.pop %v1568
    %1571 = vrot.lane.b32.xlu0 %v1569, 64
    %v1572 = vpop.permute.xlu0 %1571
    %v1574 = vmul.f32 %v1555, %v1572
    %1576 = vrot.lane.b32.xlu0 %v1574, 32
    %v1577 = vpop.permute.xlu0 %1576
    %1579 = vrot.lane.b32.xlu0 %v1462, 64
    %v1580 = vpop.permute.xlu0 %1579
    %v1582 = vsel %vm157, %v1577, %v1580
    %v1583 = vld [vmem:[#allocation10] sm:$0xff]
    %v1584 = vld [vmem:[#allocation10 + $0x8] sm:$0xff]
    %v1585 = vld [vmem:[#allocation10 + $0x10] sm:$0xff]
    %v1586 = vld [vmem:[#allocation10 + $0x18] sm:$0xff]
    %v1587 = vld [vmem:[#allocation10 + $0x20] sm:$0xff]
    %v1588 = vld [vmem:[#allocation10 + $0x28] sm:$0xff]
    %v1589 = vld [vmem:[#allocation10 + $0x30] sm:$0xff]
    %v1590 = vld [vmem:[#allocation10 + $0x38] sm:$0xff]
    %v1591 = vld [vmem:[%s11] sm:$0x1]
    %v1593 = vlaneseq
    %v1594 = vshrl.u32 %v1593, 7
    %v1595 = vsub.s32 0, %v1594
    %v1596 = vrot.slane %v1591, %v1595
    %v1599 = vsel %vm671, %v1582, 0
    %1601 = vmatprep.subr.mxu0 0.0
    %1602 = vmatpush1.msra.mxu0 %v1583
    %1603 = vmatprep.subr.mxu0 0.0
    %1604 = vmatpush1.msra.mxu0 %v1584
    %1605 = vmatprep.subr.mxu0 0.0
    %1606 = vmatpush1.msra.mxu0 %v1585
    %1607 = vmatprep.subr.mxu0 0.0
    %1608 = vmatpush1.msra.mxu0 %v1586
    %1609 = vmatprep.subr.mxu0 0.0
    %1610 = vmatpush1.msra.mxu0 %v1587
    %1611 = vmatprep.subr.mxu0 0.0
    %1612 = vmatpush1.msra.mxu0 %v1588
    %1613 = vmatprep.subr.mxu0 0.0
    %1614 = vmatpush1.msra.mxu0 %v1589
    %1615 = vmatprep.subr.mxu0 0.0
    %1616 = vmatpush1.msra.mxu0 %v1590
    %1617 = vmatprep.subr.mxu0 0.0
    %1618 = vmatpush1.msra.mxu0 0.0
    %1619 = vmatprep.subr.mxu0 0.0
    %1620 = vmatpush1.msra.mxu0 0.0
    %1621 = vmatprep.subr.mxu0 0.0
    %1622 = vmatpush1.msra.mxu0 0.0
    %1623 = vmatprep.subr.mxu0 0.0
    %1624 = vmatpush1.msra.mxu0 0.0
    %1625 = vmatprep.subr.mxu0 0.0
    %1626 = vmatpush1.msra.mxu0 0.0
    %1627 = vmatprep.subr.mxu0 0.0
    %1628 = vmatpush1.msra.mxu0 0.0
    %1629 = vmatprep.subr.mxu0 0.0
    %1630 = vmatpush1.msra.mxu0 0.0
    %1631 = vmatprep.subr.mxu0 0.0
    %1632 = vmatpush1.msra.mxu0 0.0
    %1633 = vmatprep.subr.mxu0 0.0
    %1634 = vmatpush1.msra.mxu0 0.0
    %1635 = vmatprep.subr.mxu0 0.0
    %1636 = vmatpush1.msra.mxu0 0.0
    %1637 = vmatprep.subr.mxu0 0.0
    %1638 = vmatpush1.msra.mxu0 0.0
    %1639 = vmatprep.subr.mxu0 0.0
    %1640 = vmatpush1.msra.mxu0 0.0
    %1641 = vmatprep.subr.mxu0 0.0
    %1642 = vmatpush1.msra.mxu0 0.0
    %1643 = vmatprep.subr.mxu0 0.0
    %1644 = vmatpush1.msra.mxu0 0.0
    %1645 = vmatprep.subr.mxu0 0.0
    %1646 = vmatpush1.msra.mxu0 0.0
    %1647 = vmatprep.subr.mxu0 0.0
    %1648 = vmatpush1.msra.mxu0 0.0
    %1649 = vmatprep.subr.mxu0 0.0
    %1650 = vmatpush1.msra.mxu0 0.0
    %1651 = vmatprep.subr.mxu0 0.0
    %1652 = vmatpush1.msra.mxu0 0.0
    %1653 = vmatprep.subr.mxu0 0.0
    %1654 = vmatpush1.msra.mxu0 0.0
    %1655 = vmatprep.subr.mxu0 0.0
    %1656 = vmatpush1.msra.mxu0 0.0
    %1657 = vmatprep.subr.mxu0 0.0
    %1658 = vmatpush1.msra.mxu0 0.0
    %1659 = vmatprep.subr.mxu0 0.0
    %1660 = vmatpush1.msra.mxu0 0.0
    %1661 = vmatprep.subr.mxu0 0.0
    %1662 = vmatpush1.msra.mxu0 0.0
    %1663 = vmatprep.subr.mxu0 0.0
    %1664 = vmatpush1.msra.mxu0 0.0
    %1665 = vmatprep.mubr.f32.mxu0 0.0
    %1666 = vmatmul.mubr.f32.gmra.mrb[0].mxu0 %v1599
    %v1667 = vpop.f32.mrb[0].mxu0
    %v1668 = vadd.f32 %v1596, %v1667
    %v1669 = vpop.f32.mrb[0].mxu0
    %1670 = vdwg.mxu0
    %v1671 = vxor.u32 %v1668, 2147483648
    %v1672 = vmul.f32 %v1671, 1.442695
    %v1673 = vpow.pop %v1672
    %v1674 = vadd.f32 %v1673, 1.0
    %v1675 = vrcp.pop %v1674
    %v1676 = vmul.f32 1.0, %v1675
    %v1677 = vmul.f32 %v1676, 2.0
    %v1678 = vsub.f32 %v1677, 1.0
    %v1679 = vmul.f32 %v1676, %v1456
    %1681 = vrot.lane.b32.xlu0 %v1678, 64
    %v1682 = vpop.permute.xlu0 %1681
    %v1684 = vmul.f32 %v1676, %v1682
    %1686 = vrot.lane.b32.xlu0 %v1684, 32
    %v1687 = vpop.permute.xlu0 %1686
    %v1689 = vadd.f32 %v1679, %v1687
    %v1690 = vtanh.pop %v1689
    %1692 = vrot.lane.b32.xlu0 %v1690, 64
    %v1693 = vpop.permute.xlu0 %1692
    %v1695 = vmul.f32 %v1676, %v1693
    %v1696 = vld [vmem:[#allocation12] sm:$0xff]
    %v1697 = vld [vmem:[#allocation12 + $0x8] sm:$0xff]
    %v1698 = vld [vmem:[#allocation12 + $0x10] sm:$0xff]
    %v1699 = vld [vmem:[#allocation12 + $0x18] sm:$0xff]
    %v1700 = vld [vmem:[%s13] sm:$0x1]
    %v1702 = vlaneseq
    %v1703 = vshrl.u32 %v1702, 7
    %v1704 = vsub.s32 0, %v1703
    %v1705 = vrot.slane %v1700, %v1704
    %1708 = vrot.lane.b32.xlu0 %v1695, 32
    %v1709 = vpop.permute.xlu0 %1708
    %v1710 = vsel %vm157, %v1709, 0
    %1712 = vmatprep.subr.mxu0 0.0
    %1713 = vmatpush1.msra.mxu0 %v1696
    %1714 = vmatprep.subr.mxu0 0.0
    %1715 = vmatpush1.msra.mxu0 %v1697
    %1716 = vmatprep.subr.mxu0 0.0
    %1717 = vmatpush1.msra.mxu0 %v1698
    %1718 = vmatprep.subr.mxu0 0.0
    %1719 = vmatpush1.msra.mxu0 %v1699
    %1720 = vmatprep.subr.mxu0 0.0
    %1721 = vmatpush1.msra.mxu0 0.0
    %1722 = vmatprep.subr.mxu0 0.0
    %1723 = vmatpush1.msra.mxu0 0.0
    %1724 = vmatprep.subr.mxu0 0.0
    %1725 = vmatpush1.msra.mxu0 0.0
    %1726 = vmatprep.subr.mxu0 0.0
    %1727 = vmatpush1.msra.mxu0 0.0
    %1728 = vmatprep.subr.mxu0 0.0
    %1729 = vmatpush1.msra.mxu0 0.0
    %1730 = vmatprep.subr.mxu0 0.0
    %1731 = vmatpush1.msra.mxu0 0.0
    %1732 = vmatprep.subr.mxu0 0.0
    %1733 = vmatpush1.msra.mxu0 0.0
    %1734 = vmatprep.subr.mxu0 0.0
    %1735 = vmatpush1.msra.mxu0 0.0
    %1736 = vmatprep.subr.mxu0 0.0
    %1737 = vmatpush1.msra.mxu0 0.0
    %1738 = vmatprep.subr.mxu0 0.0
    %1739 = vmatpush1.msra.mxu0 0.0
    %1740 = vmatprep.subr.mxu0 0.0
    %1741 = vmatpush1.msra.mxu0 0.0
    %1742 = vmatprep.subr.mxu0 0.0
    %1743 = vmatpush1.msra.mxu0 0.0
    %1744 = vmatprep.subr.mxu0 0.0
    %1745 = vmatpush1.msra.mxu0 0.0
    %1746 = vmatprep.subr.mxu0 0.0
    %1747 = vmatpush1.msra.mxu0 0.0
    %1748 = vmatprep.subr.mxu0 0.0
    %1749 = vmatpush1.msra.mxu0 0.0
    %1750 = vmatprep.subr.mxu0 0.0
    %1751 = vmatpush1.msra.mxu0 0.0
    %1752 = vmatprep.subr.mxu0 0.0
    %1753 = vmatpush1.msra.mxu0 0.0
    %1754 = vmatprep.subr.mxu0 0.0
    %1755 = vmatpush1.msra.mxu0 0.0
    %1756 = vmatprep.subr.mxu0 0.0
    %1757 = vmatpush1.msra.mxu0 0.0
    %1758 = vmatprep.subr.mxu0 0.0
    %1759 = vmatpush1.msra.mxu0 0.0
    %1760 = vmatprep.subr.mxu0 0.0
    %1761 = vmatpush1.msra.mxu0 0.0
    %1762 = vmatprep.subr.mxu0 0.0
    %1763 = vmatpush1.msra.mxu0 0.0
    %1764 = vmatprep.subr.mxu0 0.0
    %1765 = vmatpush1.msra.mxu0 0.0
    %1766 = vmatprep.subr.mxu0 0.0
    %1767 = vmatpush1.msra.mxu0 0.0
    %1768 = vmatprep.subr.mxu0 0.0
    %1769 = vmatpush1.msra.mxu0 0.0
    %1770 = vmatprep.subr.mxu0 0.0
    %1771 = vmatpush1.msra.mxu0 0.0
    %1772 = vmatprep.subr.mxu0 0.0
    %1773 = vmatpush1.msra.mxu0 0.0
    %1774 = vmatprep.subr.mxu0 0.0
    %1775 = vmatpush1.msra.mxu0 0.0
    %1776 = vmatprep.mubr.f32.mxu0 0.0
    %1777 = vmatmul.mubr.f32.gmra.mrb[0].mxu0 %v1710
    %v1778 = vpop.f32.mrb[0].mxu0
    %v1779 = vadd.f32 %v1705, %v1778
    %v1780 = vpop.f32.mrb[0].mxu0
    %1781 = vdwg.mxu0
    %1782 = vst [vmem:[%s14 + $0x18] sm:$0xff] %v1779
    // Predicated region
    $region86: #{lstm_tcm_forward.1} parent=1 // pred_check
      _
    $region87: #{lstm_tcm_forward.1} parent=1 // pred_check_branch
      %1784 = sbr.rel (0) target = $region89
    $region88: #{lstm_tcm_forward.1} parent=1 // pred_region
      _
    $region89: #{lstm_tcm_forward.1} parent=1 // pred_fallthru
      _
    // Predicated region
    $region90: #{lstm_tcm_forward.1} parent=1 // pred_check
      _
    $region91: #{lstm_tcm_forward.1} parent=1 // pred_check_branch
      %1786 = sbr.rel (0) target = $region93
    $region92: #{lstm_tcm_forward.1} parent=1 // pred_region
      _
    $region93: #{lstm_tcm_forward.1} parent=1 // pred_fallthru
      _
    %1787 = vsyncpa [#allocation3], 1
    %1788 = vsyncpa [#allocation5], 1
    %1789 = vsyncpa [#allocation8], 1
    %1790 = vsyncpa [#allocation11], 1

</llo_original>
